<compile_context>
chip_gen: v7x
topology: tpu7x:2x2x1
jax: 0.10.0
libtpu: 0.0.40
codegen_flags: <defaults>
</compile_context>

<pallas_src>
import functools

import jax
import jax.numpy as jnp
from jax.experimental import pallas as pl
from jax.experimental.pallas import tpu as pltpu


def _round_up(n, m):
    return ((n + m - 1) // m) * m


def _pad2d(a, rows, cols):
    r, c = a.shape
    return jnp.pad(a, ((0, rows - r), (0, cols - c)))


def gru_seq_kernel(pre_x_ref, h0_ref, wh_ref, whh_ref, out_ref, h_scr, *, hidden):
    """One timestep of the recurrence; weights stay VMEM-resident across the grid.

    pre_x_ref: (1, bt, 3*hidden) f32   x-side pre-activations (+ folded biases) for step t
    h0_ref   : (bt, hidden)      f32   initial hidden state for this batch tile
    wh_ref   : (hidden, 2*hidden)      [Wrh | Wzh]   (bf16 or f32)
    whh_ref  : (hidden, hidden)        Whh           (bf16 or f32)
    out_ref  : (1, bt, hidden)   f32   hidden state written every step (Net.gru's `outs`)
    h_scr    : (bt, hidden)      f32   carried hidden state scratch
    """
    t = pl.program_id(1)

    @pl.when(t == 0)
    def _():
        h_scr[...] = h0_ref[...]

    h = h_scr[...]                                   # (bt, Hp) f32
    pre_x = pre_x_ref[0]                             # (bt, 3Hp) f32

    # h-side matmul for the r/z gates:  (bt, 2Hp) = h @ [Wrh | Wzh]
    pre_h = jnp.dot(h.astype(wh_ref.dtype), wh_ref[...],
                    preferred_element_type=jnp.float32)

    # One wide lane-dense sigmoid for both gates.
    rz = jax.nn.sigmoid(pre_x[:, : 2 * hidden] + pre_h)
    r = rz[:, :hidden]
    z = rz[:, hidden:]

    # h_ = tanh(x@Whx + bhx + (r*h)@Whh + bhh); the x part + both biases are in pre_x.
    h_cand = jnp.tanh(
        pre_x[:, 2 * hidden:]
        + jnp.dot((r * h).astype(whh_ref.dtype), whh_ref[...],
                  preferred_element_type=jnp.float32))

    # h = z*h_1 + (1-z)*h_
    h_new = z * h + (1.0 - z) * h_cand
    h_scr[...] = h_new
    out_ref[0] = h_new.astype(out_ref.dtype)


def fuse_gru_params(p, in_dim, hidden_dim, *, weight_dtype=jnp.bfloat16):
    """Fuse/pad the 12 GRU_Cell params.

    x-side weights + biases stay f32 (used once, outside the recurrence);
    the recurrent weights wh / whh default to bf16 (f32 MXU accumulation).
    """
    Hp = _round_up(hidden_dim, 128)                      # lane-dense hidden width

    pad_cols = lambda w: jnp.pad(w.astype(jnp.float32),
                                 ((0, 0), (0, Hp - hidden_dim)))
    wpad_h = lambda w: _pad2d(w.astype(weight_dtype), Hp, Hp)

    wx = jnp.concatenate([pad_cols(p["wrx"]), pad_cols(p["wzx"]),
                          pad_cols(p["whx"])], axis=1)                      # (in_dim, 3Hp) f32
    b = jnp.concatenate([pad_cols(p["brx"] + p["brh"]),
                         pad_cols(p["bzx"] + p["bzh"]),
                         pad_cols(p["bhx"] + p["bhh"])], axis=1)            # (1, 3Hp)   f32
    wh = jnp.concatenate([wpad_h(p["wrh"]), wpad_h(p["wzh"])], axis=1)      # (Hp, 2Hp)
    whh = wpad_h(p["whh"])                                                  # (Hp, Hp)

    return {"wx": wx, "b": b, "wh": wh, "whh": whh,
            "Hp": Hp, "in_dim": in_dim, "hidden_dim": hidden_dim}


def gru_forward(x_seq, h0, fused, *, batch_tile=None):
    """Net.gru: run the GRU_Cell over a whole sequence.

    x_seq: (B, T, in_dim), h0: (B, hidden_dim)
    returns (outs (B, T, hidden_dim), h_last (B, hidden_dim))
    """
    B, T, in_dim = x_seq.shape
    hidden_dim = h0.shape[1]
    assert in_dim == fused["in_dim"] and hidden_dim == fused["hidden_dim"]
    Hp = fused["Hp"]

    Bp = _round_up(B, 8)
    bt = _round_up(batch_tile, 8) if batch_tile is not None else min(Bp, 128)
    bt = min(bt, _round_up(Bp, bt))
    Bp = _round_up(Bp, bt)
    n_bt = Bp // bt

    # ---- Hoisted x-side matmul + folded biases (no recurrence dependence). ----
    x_t = jnp.swapaxes(x_seq, 0, 1).astype(jnp.float32)          # (T, B, in_dim)
    pre_x = jnp.einsum("tbi,ih->tbh", x_t, fused["wx"],
                       precision=jax.lax.Precision.HIGHEST) + fused["b"]    # (T, B, 3Hp)
    pre_x = jnp.pad(pre_x, ((0, 0), (0, Bp - B), (0, 0)))                   # (T, Bp, 3Hp)
    h0_p = _pad2d(h0.astype(jnp.float32), Bp, Hp)                           # (Bp, Hp)

    # ---- VMEM budget: resident weights + streamed blocks + intermediates. ----
    w_itemsize = jnp.dtype(fused["wh"].dtype).itemsize
    weight_bytes = (fused["wh"].size + fused["whh"].size) * w_itemsize
    stream_bytes = 2 * bt * (3 * Hp + Hp) * 4          # double-buffered pre_x in + out
    state_bytes = 2 * bt * Hp * 4                      # h0 block + carried h scratch
    interm_bytes = bt * 8 * Hp * 4
    vmem_limit = int(min(max(2 * (weight_bytes + stream_bytes + state_bytes + interm_bytes),
                             16 * 2**20), 48 * 2**20))

    grid_spec = pltpu.PrefetchScalarGridSpec(
        num_scalar_prefetch=0,
        grid=(n_bt, T),
        in_specs=[
            pl.BlockSpec((1, bt, 3 * Hp), lambda b, t: (t, b, 0)),   # pre_x: streamed per step
            pl.BlockSpec((bt, Hp), lambda b, t: (b, 0)),             # h0: per batch tile
            pl.BlockSpec((Hp, 2 * Hp), lambda b, t: (0, 0)),         # wh: resident
            pl.BlockSpec((Hp, Hp), lambda b, t: (0, 0)),             # whh: resident
        ],
        out_specs=pl.BlockSpec((1, bt, Hp), lambda b, t: (t, b, 0)),
        scratch_shapes=[pltpu.VMEM((bt, Hp), jnp.float32)],
    )

    out_p = pl.pallas_call(
        functools.partial(gru_seq_kernel, hidden=Hp),
        out_shape=jax.ShapeDtypeStruct((T, Bp, Hp), jnp.float32),
        grid_spec=grid_spec,
        compiler_params=pltpu.CompilerParams(
            dimension_semantics=("parallel", "arbitrary"),
            vmem_limit_bytes=vmem_limit),
    )(pre_x, h0_p, fused["wh"], fused["whh"])

    outs = jnp.swapaxes(out_p[:, :B, :hidden_dim], 0, 1)   # (B, T, hidden)
    h_last = out_p[T - 1, :B, :hidden_dim]                  # (B, hidden)
    return outs, h_last


def init_params(key, in_dim, hidden_dim, dtype=jnp.float32):
    """Deterministic init mirroring nn.Linear shapes (weights stored transposed)."""
    names_in = ["rx", "zx", "hx"]   # take in_dim inputs
    names_h = ["rh", "zh", "hh"]    # take hidden_dim inputs
    params = {}
    keys = jax.random.split(key, 12)
    k = 0
    for name in names_in:
        bound = 1.0 / jnp.sqrt(in_dim)
        params[f"w{name}"] = jax.random.uniform(
            keys[k], (in_dim, hidden_dim), dtype, -bound, bound); k += 1
        params[f"b{name}"] = jax.random.uniform(
            keys[k], (1, hidden_dim), dtype, -bound, bound); k += 1
    for name in names_h:
        bound = 1.0 / jnp.sqrt(hidden_dim)
        params[f"w{name}"] = jax.random.uniform(
            keys[k], (hidden_dim, hidden_dim), dtype, -bound, bound); k += 1
        params[f"b{name}"] = jax.random.uniform(
            keys[k], (1, hidden_dim), dtype, -bound, bound); k += 1
    return params


def gru_seq_ref(x_seq, h0, p, *, matmul_dtype=jnp.float32):
    """Plain-JAX reference of Net.gru (matches GRU_Cell.forward unrolled in time).

    matmul_dtype controls only the h-side matmul input dtype so the bf16-weight
    kernel can be checked with tight tolerances.
    """
    hi = jax.lax.Precision.HIGHEST
    dx = lambda a, w: jnp.dot(a, w, precision=hi)
    dh = lambda a, w: jnp.dot(a.astype(matmul_dtype), w.astype(matmul_dtype),
                              preferred_element_type=jnp.float32, precision=hi)

    def step(h, x):
        r = jax.nn.sigmoid(dx(x, p["wrx"]) + p["brx"] + dh(h, p["wrh"]) + p["brh"])
        z = jax.nn.sigmoid(dx(x, p["wzx"]) + p["bzx"] + dh(h, p["wzh"]) + p["bzh"])
        h_ = jnp.tanh(dx(x, p["whx"]) + p["bhx"] + dh(r * h, p["whh"]) + p["bhh"])
        h_new = z * h + (1.0 - z) * h_
        return h_new, h_new

    x_t = jnp.swapaxes(x_seq, 0, 1)                      # (T, B, in_dim)
    h_last, outs = jax.lax.scan(step, h0, x_t)
    return jnp.swapaxes(outs, 0, 1), h_last


if __name__ == "__main__":
    key = jax.random.PRNGKey(0)
    k_x, k_h, k_p = jax.random.split(key, 3)

    # Shapes implied by Net: rnn_cell = GRU_Cell(in_dim=1, hidden_dim=400);
    # Net.gru loops over the sequence dim of x (B, T, 1).
    B, T, in_dim, hidden_dim = 8, 16, 1, 400
    x_seq = jax.random.normal(k_x, (B, T, in_dim), jnp.float32)
    h0 = jax.random.normal(k_h, (B, hidden_dim), jnp.float32)
    params = init_params(k_p, in_dim, hidden_dim)

    # Default path: bf16 recurrent weights, f32 accumulation + gate math.
    fused_bf16 = fuse_gru_params(params, in_dim, hidden_dim)
    outs, h_last = gru_forward(x_seq, h0, fused_bf16)
    jax.block_until_ready((outs, h_last))
    assert outs.shape == (B, T, hidden_dim) and h_last.shape == (B, hidden_dim)

    outs_ref_bf, h_ref_bf = gru_seq_ref(x_seq, h0, params, matmul_dtype=jnp.bfloat16)
    assert jnp.allclose(outs, outs_ref_bf, atol=5e-3, rtol=5e-3)
    assert jnp.allclose(h_last, h_ref_bf, atol=5e-3, rtol=5e-3)

    # f32-weight path, tight check against the full-precision reference.
    fused_f32 = fuse_gru_params(params, in_dim, hidden_dim, weight_dtype=jnp.float32)
    outs32, h32 = gru_forward(x_seq, h0, fused_f32)
    jax.block_until_ready((outs32, h32))
    outs_ref32, h_ref32 = gru_seq_ref(x_seq, h0, params, matmul_dtype=jnp.float32)
    assert jnp.allclose(outs32, outs_ref32, atol=1e-3, rtol=1e-3)
    assert jnp.allclose(h32, h_ref32, atol=1e-3, rtol=1e-3)

    print("KERNEL_OK")
</pallas_src>

<mosaic_0001>
module attributes {stable_mosaic.version = 11 : i64} {
  func.func @gru_seq_kernel(%arg0: i32, %arg1: i32, %arg2: memref<1x8x1536xf32, #tpu.memory_space<vmem>>, %arg3: memref<8x512xf32, #tpu.memory_space<vmem>>, %arg4: memref<512x1024xbf16, #tpu.memory_space<vmem>>, %arg5: memref<512x512xbf16, #tpu.memory_space<vmem>>, %arg6: memref<1x8x512xf32, #tpu.memory_space<vmem>>, %arg7: memref<8x512xf32, #tpu.memory_space<vmem>>) attributes {dimension_semantics = [#tpu.dimension_semantics<parallel>, #tpu.dimension_semantics<arbitrary>], iteration_bounds = array<i64: 1, 16>, scalar_prefetch = 0 : i64, scratch_operands = 1 : i64, tpu.core_type = #tpu.core_type<tc>, window_params = [{transform_indices = @transform_0, window_bounds = array<i64: 1, 8, 1536>}, {transform_indices = @transform_1, window_bounds = array<i64: 8, 512>}, {pipeline_mode = #tpu.pipeline_mode<synchronous>, transform_indices = @transform_2, window_bounds = array<i64: 512, 1024>}, {pipeline_mode = #tpu.pipeline_mode<synchronous>, transform_indices = @transform_3, window_bounds = array<i64: 512, 512>}, {transform_indices = @transform_4, window_bounds = array<i64: 1, 8, 512>}]} {
    %c0_i32 = arith.constant 0 : i32
    %0 = arith.cmpi eq, %arg1, %c0_i32 : i32
    %1 = arith.extui %0 : i1 to i32
    %c0_i32_0 = arith.constant 0 : i32
    %2 = arith.cmpi ne, %1, %c0_i32_0 : i32
    scf.if %2 {
      %c0_17 = arith.constant 0 : index
      %c0_18 = arith.constant 0 : index
      %34 = vector.load %arg3[%c0_17, %c0_18] : memref<8x512xf32, #tpu.memory_space<vmem>>, vector<8x512xf32>
      %c0_19 = arith.constant 0 : index
      %c0_20 = arith.constant 0 : index
      %35 = vector.load %arg7[%c0_19, %c0_20] : memref<8x512xf32, #tpu.memory_space<vmem>>, vector<8x512xf32>
      tpu.vector_store %arg7[%c0_19, %c0_20], %34 {strides = array<i32>} : memref<8x512xf32, #tpu.memory_space<vmem>>, vector<8x512xf32>,
    } else {
    }
    %c0 = arith.constant 0 : index
    %c0_1 = arith.constant 0 : index
    %3 = vector.load %arg7[%c0, %c0_1] : memref<8x512xf32, #tpu.memory_space<vmem>>, vector<8x512xf32>
    %c0_2 = arith.constant 0 : index
    %c0_3 = arith.constant 0 : index
    %c0_4 = arith.constant 0 : index
    %4 = vector.load %arg2[%c0_2, %c0_3, %c0_4] : memref<1x8x1536xf32, #tpu.memory_space<vmem>>, vector<1x8x1536xf32>
    %5 = vector.shape_cast %4 : vector<1x8x1536xf32> to vector<8x1536xf32>
    %6 = arith.truncf %3 : vector<8x512xf32> to vector<8x512xbf16>
    %c0_5 = arith.constant 0 : index
    %c0_6 = arith.constant 0 : index
    %7 = vector.load %arg4[%c0_5, %c0_6] : memref<512x1024xbf16, #tpu.memory_space<vmem>>, vector<512x1024xbf16>
    %cst = arith.constant dense<0.000000e+00> : vector<8x1024xf32>
    %8 = tpu.matmul %6, %7, %cst {dimension_numbers = #tpu.dot_dimension_numbers<[1], [0], [0], [1], [0, 0, 1, 1], [], []>} : vector<8x512xbf16>, vector<512x1024xbf16>, vector<8x1024xf32> -> vector<8x1024xf32>
    %9 = vector.extract_strided_slice %5 {offsets = [0, 0], sizes = [8, 1024], strides = [1, 1]} : vector<8x1536xf32> to vector<8x1024xf32>
    %10 = arith.addf %9, %8 : vector<8x1024xf32>
    %11 = arith.negf %10 : vector<8x1024xf32>
    %12 = math.exp %11 : vector<8x1024xf32>
    %cst_7 = arith.constant 1.000000e+00 : f32
    %13 = vector.broadcast %cst_7 : f32 to vector<8x1024xf32>
    %14 = arith.addf %13, %12 : vector<8x1024xf32>
    %15 = arith.divf %13, %14 : vector<8x1024xf32>
    %16 = vector.extract_strided_slice %15 {offsets = [0, 0], sizes = [8, 512], strides = [1, 1]} : vector<8x1024xf32> to vector<8x512xf32>
    %17 = vector.extract_strided_slice %15 {offsets = [0, 512], sizes = [8, 512], strides = [1, 1]} : vector<8x1024xf32> to vector<8x512xf32>
    %18 = vector.extract_strided_slice %5 {offsets = [0, 1024], sizes = [8, 512], strides = [1, 1]} : vector<8x1536xf32> to vector<8x512xf32>
    %19 = arith.mulf %16, %3 : vector<8x512xf32>
    %20 = arith.truncf %19 : vector<8x512xf32> to vector<8x512xbf16>
    %c0_8 = arith.constant 0 : index
    %c0_9 = arith.constant 0 : index
    %21 = vector.load %arg5[%c0_8, %c0_9] : memref<512x512xbf16, #tpu.memory_space<vmem>>, vector<512x512xbf16>
    %cst_10 = arith.constant dense<0.000000e+00> : vector<8x512xf32>
    %22 = tpu.matmul %20, %21, %cst_10 {dimension_numbers = #tpu.dot_dimension_numbers<[1], [0], [0], [1], [0, 0, 1, 1], [], []>} : vector<8x512xbf16>, vector<512x512xbf16>, vector<8x512xf32> -> vector<8x512xf32>
    %23 = arith.addf %18, %22 : vector<8x512xf32>
    %24 = math.tanh %23 : vector<8x512xf32>
    %25 = arith.mulf %17, %3 : vector<8x512xf32>
    %cst_11 = arith.constant 1.000000e+00 : f32
    %26 = vector.broadcast %cst_11 : f32 to vector<8x512xf32>
    %27 = arith.subf %26, %17 : vector<8x512xf32>
    %28 = arith.mulf %27, %24 : vector<8x512xf32>
    %29 = arith.addf %25, %28 : vector<8x512xf32>
    %c0_12 = arith.constant 0 : index
    %c0_13 = arith.constant 0 : index
    %30 = vector.load %arg7[%c0_12, %c0_13] : memref<8x512xf32, #tpu.memory_space<vmem>>, vector<8x512xf32>
    tpu.vector_store %arg7[%c0_12, %c0_13], %29 {strides = array<i32>} : memref<8x512xf32, #tpu.memory_space<vmem>>, vector<8x512xf32>,
    %c0_14 = arith.constant 0 : index
    %c0_15 = arith.constant 0 : index
    %c0_16 = arith.constant 0 : index
    %31 = vector.load %arg6[%c0_14, %c0_15, %c0_16] : memref<1x8x512xf32, #tpu.memory_space<vmem>>, vector<1x8x512xf32>
    %32 = vector.shape_cast %31 : vector<1x8x512xf32> to vector<8x512xf32>
    %33 = vector.shape_cast %29 : vector<8x512xf32> to vector<1x8x512xf32>
    tpu.vector_store %arg6[%c0_14, %c0_15, %c0_16], %33 {strides = array<i32>} : memref<1x8x512xf32, #tpu.memory_space<vmem>>, vector<1x8x512xf32>,
    return
  }
  func.func @transform_0(%arg0: i32, %arg1: i32) -> (i32, i32, i32) {
    %c0_i32 = arith.constant 0 : i32
    %c0_i32_0 = arith.constant 0 : i32
    return %arg1, %arg0, %c0_i32 : i32, i32, i32
  }
  func.func @transform_1(%arg0: i32, %arg1: i32) -> (i32, i32) {
    %c0_i32 = arith.constant 0 : i32
    %c0_i32_0 = arith.constant 0 : i32
    return %arg0, %c0_i32 : i32, i32
  }
  func.func @transform_2(%arg0: i32, %arg1: i32) -> (i32, i32) {
    %c0_i32 = arith.constant 0 : i32
    %c0_i32_0 = arith.constant 0 : i32
    %c0_i32_1 = arith.constant 0 : i32
    return %c0_i32, %c0_i32_0 : i32, i32
  }
  func.func @transform_3(%arg0: i32, %arg1: i32) -> (i32, i32) {
    %c0_i32 = arith.constant 0 : i32
    %c0_i32_0 = arith.constant 0 : i32
    %c0_i32_1 = arith.constant 0 : i32
    return %c0_i32, %c0_i32_0 : i32, i32
  }
  func.func @transform_4(%arg0: i32, %arg1: i32) -> (i32, i32, i32) {
    %c0_i32 = arith.constant 0 : i32
    %c0_i32_0 = arith.constant 0 : i32
    return %arg1, %arg0, %c0_i32 : i32, i32, i32
  }
}

</mosaic_0001>

<llo_original>
// kernel: tpu_custom_call.1
$region0: #{tpu_custom_call.1}
  #allocation0 [shape = 'u32[]', space=smem, size = 0x4, offset = 0x4, fixed_abs, tag = 'smem constant byte address 0x4 - core index']
  #allocation1 [shape = 'u32[144,128]{1,0:T(1,128)}', space=vmem, size = 0x12000, scoped, tag = 'internal scratch']
  #allocation2 [shape = 'f32[8,512]{1,0:T(8,128)}', space=vmem, size = 0x4000, scoped, tag = 'scratch operand']
  %s0 = inlined_call_operand.hbm [shape: f32[16,8,1536], index: 0, kind: input, shape index: {}]
  %s1 = inlined_call_operand.hbm [shape: f32[8,512], index: 1, kind: input, shape index: {}]
  %s2 = inlined_call_operand.hbm [shape: bf16[512,1024], index: 2, kind: input, shape index: {}]
  %s3 = inlined_call_operand.hbm [shape: bf16[512,512], index: 3, kind: input, shape index: {}]
  %s4 = inlined_call_operand.hbm [shape: f32[16,8,512], index: 4, kind: output, shape index: {}]
  %s5 = sld [smem:[#allocation0]]
  $region69: #{tpu_custom_call.1} parent=0
    _
  %s7 = ssub.s32 1, %s5
  %s8 = scalar_select 0, %s7, %s5
  $region1: #{tpu_custom_call.1} parent=0
    #allocation3 [shape = 'u8[98304]{0}', space=vmem, size = 0x18000, scoped, tag = 'input window, operand 0']
    #allocation4 [shape = 's32[2]{0}', space=sflag, size = 0x8, scoped, tag = 'scoped memory for tpu_custom_call.1']
    #allocation5 [shape = 's32[2]{0}', space=sflag, size = 0x8, scoped, tag = 'scoped memory for tpu_custom_call.1']
    #allocation6 [shape = 'u8[16384]{0}', space=vmem, size = 0x4000, scoped, tag = 'input window, operand 1, single buffered']
    #allocation7 [shape = 's32[1]{0}', space=sflag, size = 0x4, scoped, tag = 'scoped memory for tpu_custom_call.1']
    #allocation8 [shape = 'u8[1048576]{0}', space=vmem, size = 0x100000, scoped, tag = 'input window, operand 2, single buffered']
    #allocation9 [shape = 'u8[524288]{0}', space=vmem, size = 0x80000, scoped, tag = 'input window, operand 3, single buffered']
    #allocation10 [shape = 's32[1]{0}', space=sflag, size = 0x4, scoped, tag = 'scoped memory for tpu_custom_call.1']
    #allocation11 [shape = 'u8[32768]{0}', space=vmem, size = 0x8000, scoped, tag = 'output window, operand 0']
    %9 = vsyncpa [#allocation4], 0
    %s10 = scalar_lea.sflag [#allocation4], 1
    %11 = vsyncpa %s10, 0
    %12 = vsyncpa [#allocation7], 0
    %13 = vsyncpa [#allocation10], 0
    %14 = vsyncpa [#allocation5], 0
    %s15 = scalar_lea.sflag [#allocation5], 1
    %16 = vsyncpa %s15, 0
    loop: start=0, step=1, limit=18
    $region2: #{tpu_custom_call.1} parent=1 // loop_pre_header
      _
    $region3: #{tpu_custom_call.1} parent=1 // loop_header
      %s18 = sphi 0, %s22
      %p19 = scmp.ge.s32.totalorder %s18, 18
      %s25 = sphi 0, %s37
      %s26 = sphi 0, %s33
      %s27 = sphi 0, %s25
      %s28 = sphi 0, %s26
      %s29 = sphi 0, %s27
      %s30 = sphi 0, %s28
      %s42 = sphi 0, %s44
      %s45 = sphi 0, %s42
      %s46 = sphi 0, %s45
      %s62 = sphi 0, %s46
      %s68 = sphi 0, %s70
      %s71 = sphi 0, %s68
      %s72 = sphi 0, %s71
      %s88 = sphi 0, %s72
      %s92 = sphi 0, %s92
      %s94 = sphi 0, %s92
      %s95 = sphi 0, %s94
      %s109 = sphi 0, %s95
      %s113 = sphi 0, %s113
      %s115 = sphi 0, %s113
      %s116 = sphi 0, %s115
      %s130 = sphi 0, %s116
      %s138 = sphi 0, %s140
      %s141 = sphi 0, %s138
      %s142 = sphi 0, %s141
      %s158 = sphi 0, %s142
    $region4: #{tpu_custom_call.1} parent=1 // loop_header_branch
      %21 = sbr.rel (%p19) target = $region8
    $region5: #{tpu_custom_call.1} parent=1 // loop_body
      %s23 = ssub.s32 %s18, 1
      %s24 = ssub.s32 %s18, 2
      %s31 = sadd.s32 1, %s26
      %p32 = scmp.ge.s32.totalorder %s31, 16
      %s33 = scalar_select %p32, 0, %s31
      %s34 = sadd.s32 1, %s25
      %s35 = scalar_select %p32, %s34, %s25
      %p36 = scmp.ge.s32.totalorder %s35, 1
      %s37 = scalar_select %p36, 0, %s35
      %s38 = ssub.s32 %s26, %s33
      %s39 = ssub.s32 %s25, %s37
      %s40 = sor.u32 %s38, %s39
      %p41 = scmp.eq.s32.totalorder %s40, 0
      %s43 = sadd.s32 %s42, 1
      %s44 = scalar_select %p41, %s42, %s43
      %p47 = pneg %p41
      %p48 = scmp.eq.s32.totalorder %s18, 15
      %p49 = por %p47, %p48
      %p50 = scmp.ne.s32.totalorder %s42, %s45
      %p51 = scmp.eq.s32.totalorder %s18, 0
      %p52 = por %p50, %p51
      %p53 = scmp.ne.s32.totalorder %s42, %s45
      %p54 = scmp.eq.s32.totalorder %s23, 15
      %p55 = por %p53, %p54
      %p56 = scmp.ne.s32.totalorder %s45, %s46
      %p57 = scmp.eq.s32.totalorder %s23, 0
      %p58 = por %p56, %p57
      %p59 = scmp.ne.s32.totalorder %s45, %s46
      %p60 = scmp.eq.s32.totalorder %s24, 15
      %p61 = por %p59, %p60
      %p63 = scmp.ne.s32.totalorder %s46, %s62
      %p64 = scmp.eq.s32.totalorder %s24, 0
      %p65 = por %p63, %p64
      %s66 = ssub.s32 %s25, %s37
      %p67 = scmp.eq.s32.totalorder %s66, 0
      %s69 = sadd.s32 %s68, 1
      %s70 = scalar_select %p67, %s68, %s69
      %p73 = pneg %p67
      %p74 = scmp.eq.s32.totalorder %s18, 15
      %p75 = por %p73, %p74
      %p76 = scmp.ne.s32.totalorder %s68, %s71
      %p77 = scmp.eq.s32.totalorder %s18, 0
      %p78 = por %p76, %p77
      %p79 = scmp.ne.s32.totalorder %s68, %s71
      %p80 = scmp.eq.s32.totalorder %s23, 15
      %p81 = por %p79, %p80
      %p82 = scmp.ne.s32.totalorder %s71, %s72
      %p83 = scmp.eq.s32.totalorder %s23, 0
      %p84 = por %p82, %p83
      %p85 = scmp.ne.s32.totalorder %s71, %s72
      %p86 = scmp.eq.s32.totalorder %s24, 15
      %p87 = por %p85, %p86
      %p89 = scmp.ne.s32.totalorder %s72, %s88
      %p90 = scmp.eq.s32.totalorder %s24, 0
      %p91 = por %p89, %p90
      %s93 = sadd.s32 %s92, 1
      %p96 = scmp.eq.s32.totalorder %s18, 15
      %p97 = scmp.ne.s32.totalorder %s92, %s94
      %p98 = scmp.eq.s32.totalorder %s18, 0
      %p99 = por %p97, %p98
      %p100 = scmp.ne.s32.totalorder %s92, %s94
      %p101 = scmp.eq.s32.totalorder %s23, 15
      %p102 = por %p100, %p101
      %p103 = scmp.ne.s32.totalorder %s94, %s95
      %p104 = scmp.eq.s32.totalorder %s23, 0
      %p105 = por %p103, %p104
      %p106 = scmp.ne.s32.totalorder %s94, %s95
      %p107 = scmp.eq.s32.totalorder %s24, 15
      %p108 = por %p106, %p107
      %p110 = scmp.ne.s32.totalorder %s95, %s109
      %p111 = scmp.eq.s32.totalorder %s24, 0
      %p112 = por %p110, %p111
      %s114 = sadd.s32 %s113, 1
      %p117 = scmp.eq.s32.totalorder %s18, 15
      %p118 = scmp.ne.s32.totalorder %s113, %s115
      %p119 = scmp.eq.s32.totalorder %s18, 0
      %p120 = por %p118, %p119
      %p121 = scmp.ne.s32.totalorder %s113, %s115
      %p122 = scmp.eq.s32.totalorder %s23, 15
      %p123 = por %p121, %p122
      %p124 = scmp.ne.s32.totalorder %s115, %s116
      %p125 = scmp.eq.s32.totalorder %s23, 0
      %p126 = por %p124, %p125
      %p127 = scmp.ne.s32.totalorder %s115, %s116
      %p128 = scmp.eq.s32.totalorder %s24, 15
      %p129 = por %p127, %p128
      %p131 = scmp.ne.s32.totalorder %s116, %s130
      %p132 = scmp.eq.s32.totalorder %s24, 0
      %p133 = por %p131, %p132
      %s134 = ssub.s32 %s26, %s33
      %s135 = ssub.s32 %s25, %s37
      %s136 = sor.u32 %s134, %s135
      %p137 = scmp.eq.s32.totalorder %s136, 0
      %s139 = sadd.s32 %s138, 1
      %s140 = scalar_select %p137, %s138, %s139
      %p143 = pneg %p137
      %p144 = scmp.eq.s32.totalorder %s18, 15
      %p145 = por %p143, %p144
      %p146 = scmp.ne.s32.totalorder %s138, %s141
      %p147 = scmp.eq.s32.totalorder %s18, 0
      %p148 = por %p146, %p147
      %p149 = scmp.ne.s32.totalorder %s138, %s141
      %p150 = scmp.eq.s32.totalorder %s23, 15
      %p151 = por %p149, %p150
      %p152 = scmp.ne.s32.totalorder %s141, %s142
      %p153 = scmp.eq.s32.totalorder %s23, 0
      %p154 = por %p152, %p153
      %p155 = scmp.ne.s32.totalorder %s141, %s142
      %p156 = scmp.eq.s32.totalorder %s24, 15
      %p157 = por %p155, %p156
      %p159 = scmp.ne.s32.totalorder %s142, %s158
      %p160 = scmp.eq.s32.totalorder %s24, 0
      %p161 = por %p159, %p160
      %p162 = scmp.le.s32.totalorder 1, %s18
      %p163 = scmp.lt.s32.totalorder %s18, 17
      %p164 = pnand %p162, %p163
      %p165 = pneg %p164
      // Predicated region
      $region9: #{tpu_custom_call.1} parent=5 // pred_check
        _
      $region10: #{tpu_custom_call.1} parent=5 // pred_check_branch
        %167 = sbr.rel (%p164) target = $region12
      $region11: #{tpu_custom_call.1} parent=5 // pred_region
        %s168 = ssub.s32 %s18, 1
        // Predicated region
        $region13: #{tpu_custom_call.1} parent=11 // pred_check
          %p169 = pneg %p84
        $region14: #{tpu_custom_call.1} parent=11 // pred_check_branch
          %171 = sbr.rel (%p169) target = $region16
        $region15: #{tpu_custom_call.1} parent=11 // pred_region
          %s173 = ssub.s32 512, 512
          %174 = vsyncadd [#allocation7], %s173
          %s175 = smul.addr %s27, 4
          %s176 = smul.addr %s175, 128
          %s177 = scalar_lea.hbm %s1, %s176
          %s179 = sshll.u32 [#allocation6], 4
          %s180 = int_to_ptr.vmem [resolvable:$true] %s179
          %182 = dma.hbm_to_vmem [thread:$0]  %s177, 512, %s180, [#allocation7]
        $region16: #{tpu_custom_call.1} parent=11 // pred_fallthru
          _
        // Predicated region
        $region17: #{tpu_custom_call.1} parent=11 // pred_check
          %p183 = pneg %p105
        $region18: #{tpu_custom_call.1} parent=11 // pred_check_branch
          %185 = sbr.rel (%p183) target = $region20
        $region19: #{tpu_custom_call.1} parent=11 // pred_region
          %s187 = ssub.s32 32768, 32768
          %188 = vsyncadd [#allocation7], %s187
          %s189 = sshll.u32 [#allocation8], 4
          %s190 = int_to_ptr.vmem [resolvable:$true] %s189
          %195 = dma.hbm_to_vmem [thread:$0]  %s2, 32768, %s190, [#allocation7], 512, 512, 32
        $region20: #{tpu_custom_call.1} parent=11 // pred_fallthru
          _
        // Predicated region
        $region21: #{tpu_custom_call.1} parent=11 // pred_check
          %p196 = pneg %p126
        $region22: #{tpu_custom_call.1} parent=11 // pred_check_branch
          %198 = sbr.rel (%p196) target = $region24
        $region23: #{tpu_custom_call.1} parent=11 // pred_region
          %s200 = ssub.s32 16384, 16384
          %201 = vsyncadd [#allocation10], %s200
          %s202 = sshll.u32 [#allocation9], 4
          %s203 = int_to_ptr.vmem [resolvable:$true] %s202
          %208 = dma.hbm_to_vmem [thread:$0]  %s3, 16384, %s203, [#allocation10], 256, 256, 16
        $region24: #{tpu_custom_call.1} parent=11 // pred_fallthru
          _
      $region12: #{tpu_custom_call.1} parent=5 // pred_fallthru
        _
      %p209 = scmp.lt.s32.totalorder %s18, 16
      // Predicated region
      $region25: #{tpu_custom_call.1} parent=5 // pred_check
        %p210 = pneg %p209
      $region26: #{tpu_custom_call.1} parent=5 // pred_check_branch
        %212 = sbr.rel (%p210) target = $region28
      $region27: #{tpu_custom_call.1} parent=5 // pred_region
        // Predicated region
        $region29: #{tpu_custom_call.1} parent=27 // pred_check
          %p213 = pneg %p52
        $region30: #{tpu_custom_call.1} parent=27 // pred_check_branch
          %215 = sbr.rel (%p213) target = $region32
        $region31: #{tpu_custom_call.1} parent=27 // pred_region
          %s216 = sand.u32 %s42, 1
          %s217 = scalar_lea.sflag [#allocation4], %s216
          %s218 = sand.u32 %s42, 1
          %s219 = smul.addr %s218, 96
          %s220 = scalar_lea.vmem [#allocation3], %s219
          %s222 = ssub.s32 1536, 1536
          %223 = vsyncadd %s217, %s222
          %s224 = smul.addr %s25, 12
          %s225 = smul.addr %s26, 12
          %s226 = sadd.s32 %s224, %s225
          %s227 = smul.addr %s226, 128
          %s228 = scalar_lea.hbm %s0, %s227
          %s230 = sshll.u32 %s220, 4
          %s231 = int_to_ptr.vmem [resolvable:$true] %s230
          %233 = dma.hbm_to_vmem [thread:$0]  %s228, 1536, %s231, %s217
        $region32: #{tpu_custom_call.1} parent=27 // pred_fallthru
          _
      $region28: #{tpu_custom_call.1} parent=5 // pred_fallthru
        _
      %p234 = scmp.le.s32.totalorder 1, %s18
      %p235 = scmp.lt.s32.totalorder %s18, 17
      %p236 = pnand %p234, %p235
      %p237 = pneg %p236
      // Predicated region
      $region33: #{tpu_custom_call.1} parent=5 // pred_check
        _
      $region34: #{tpu_custom_call.1} parent=5 // pred_check_branch
        %239 = sbr.rel (%p236) target = $region36
      $region35: #{tpu_custom_call.1} parent=5 // pred_region
        %s240 = ssub.s32 %s18, 1
        %s241 = sand.u32 %s45, 1
        %s242 = scalar_lea.sflag [#allocation4], %s241
        %s243 = sand.u32 %s45, 1
        %s244 = smul.addr %s243, 96
        %s245 = scalar_lea.vmem [#allocation3], %s244
        // Predicated region
        $region37: #{tpu_custom_call.1} parent=35 // pred_check
          %p246 = pneg %p58
        $region38: #{tpu_custom_call.1} parent=35 // pred_check_branch
          %248 = sbr.rel (%p246) target = $region40
        $region39: #{tpu_custom_call.1} parent=35 // pred_region
          %249 = dma.done %s242, 1536
        $region40: #{tpu_custom_call.1} parent=35 // pred_fallthru
          _
        // Predicated region
        $region41: #{tpu_custom_call.1} parent=35 // pred_check
          %p250 = pneg %p84
        $region42: #{tpu_custom_call.1} parent=35 // pred_check_branch
          %252 = sbr.rel (%p250) target = $region44
        $region43: #{tpu_custom_call.1} parent=35 // pred_region
          %253 = dma.done [#allocation7], 512
        $region44: #{tpu_custom_call.1} parent=35 // pred_fallthru
          _
        // Predicated region
        $region45: #{tpu_custom_call.1} parent=35 // pred_check
          %p254 = pneg %p105
        $region46: #{tpu_custom_call.1} parent=35 // pred_check_branch
          %256 = sbr.rel (%p254) target = $region48
        $region47: #{tpu_custom_call.1} parent=35 // pred_region
          %257 = dma.done [#allocation7], 32768
        $region48: #{tpu_custom_call.1} parent=35 // pred_fallthru
          _
        // Predicated region
        $region49: #{tpu_custom_call.1} parent=35 // pred_check
          %p258 = pneg %p126
        $region50: #{tpu_custom_call.1} parent=35 // pred_check_branch
          %260 = sbr.rel (%p258) target = $region52
        $region51: #{tpu_custom_call.1} parent=35 // pred_region
          %261 = dma.done [#allocation10], 16384
        $region52: #{tpu_custom_call.1} parent=35 // pred_fallthru
          _
        %s262 = sand.u32 %s45, 1
        %s263 = scalar_lea.sflag [#allocation4], %s262
        %s264 = sand.u32 %s45, 1
        %s265 = smul.addr %s264, 96
        %s266 = scalar_lea.vmem [#allocation3], %s265
        %p267 = pneg %p58
        %p268 = pneg %p55
        %p269 = pneg %p84
        %p270 = pneg %p81
        %p271 = pneg %p105
        %p272 = pneg %p102
        %p273 = pneg %p126
        %p274 = pneg %p123
        %p275 = pneg %p154
        %p276 = pneg %p151
        %s277 = sand.u32 %s141, 1
        %s278 = scalar_lea.sflag [#allocation5], %s277
        %s279 = sand.u32 %s141, 1
        %s280 = smul.addr %s279, 32
        %s281 = scalar_lea.vmem [#allocation11], %s280
        %p282 = scmp.eq.s32.totalorder %s28, 0
        // Predicated region
        $region53: #{tpu_custom_call.1} parent=35 // pred_check
          %p283 = pneg %p282
        $region54: #{tpu_custom_call.1} parent=35 // pred_check_branch
          %285 = sbr.rel (%p283) target = $region56
        $region55: #{tpu_custom_call.1} parent=35 // pred_region
          %v286 = vld [vmem:[#allocation6] sm:$0xff]
          %v287 = vld [vmem:[#allocation6 + $0x8] sm:$0xff]
          %v288 = vld [vmem:[#allocation6 + $0x10] sm:$0xff]
          %v289 = vld [vmem:[#allocation6 + $0x18] sm:$0xff]
          %290 = vst [vmem:[#allocation2] sm:$0xff] %v286
          %291 = vst [vmem:[#allocation2 + $0x8] sm:$0xff] %v287
          %292 = vst [vmem:[#allocation2 + $0x10] sm:$0xff] %v288
          %293 = vst [vmem:[#allocation2 + $0x18] sm:$0xff] %v289
        $region56: #{tpu_custom_call.1} parent=35 // pred_fallthru
          _
        %v294 = vld [vmem:[#allocation2] sm:$0xff]
        %v295 = vld [vmem:[#allocation2 + $0x8] sm:$0xff]
        %v296 = vld [vmem:[#allocation2 + $0x10] sm:$0xff]
        %v297 = vld [vmem:[#allocation2 + $0x18] sm:$0xff]
        %v298 = vld [vmem:[%s245] sm:$0xff]
        %v299 = vld [vmem:[%s245 + $0x8] sm:$0xff]
        %v300 = vld [vmem:[%s245 + $0x10] sm:$0xff]
        %v301 = vld [vmem:[%s245 + $0x18] sm:$0xff]
        %v302 = vld [vmem:[%s245 + $0x20] sm:$0xff]
        %v303 = vld [vmem:[%s245 + $0x28] sm:$0xff]
        %v304 = vld [vmem:[%s245 + $0x30] sm:$0xff]
        %v305 = vld [vmem:[%s245 + $0x38] sm:$0xff]
        %v306 = vld [vmem:[%s245 + $0x40] sm:$0xff]
        %v307 = vld [vmem:[%s245 + $0x48] sm:$0xff]
        %v308 = vld [vmem:[%s245 + $0x50] sm:$0xff]
        %v309 = vld [vmem:[%s245 + $0x58] sm:$0xff]
        %v310 = vpack.c.bf16 %v294, %v294
        %v311 = vpack.c.bf16 %v295, %v295
        %v312 = vpack.c.bf16 %v296, %v296
        %v313 = vpack.c.bf16 %v297, %v297
        %v314 = vld [vmem:[#allocation8] sm:$0xff]
        %v315 = vld [vmem:[#allocation8 + $0x8] sm:$0xff]
        %v316 = vld [vmem:[#allocation8 + $0x10] sm:$0xff]
        %v317 = vld [vmem:[#allocation8 + $0x18] sm:$0xff]
        %v318 = vld [vmem:[#allocation8 + $0x20] sm:$0xff]
        %v319 = vld [vmem:[#allocation8 + $0x28] sm:$0xff]
        %v320 = vld [vmem:[#allocation8 + $0x30] sm:$0xff]
        %v321 = vld [vmem:[#allocation8 + $0x38] sm:$0xff]
        %v322 = vld [vmem:[#allocation8 + $0x40] sm:$0xff]
        %v323 = vld [vmem:[#allocation8 + $0x48] sm:$0xff]
        %v324 = vld [vmem:[#allocation8 + $0x50] sm:$0xff]
        %v325 = vld [vmem:[#allocation8 + $0x58] sm:$0xff]
        %v326 = vld [vmem:[#allocation8 + $0x60] sm:$0xff]
        %v327 = vld [vmem:[#allocation8 + $0x68] sm:$0xff]
        %v328 = vld [vmem:[#allocation8 + $0x70] sm:$0xff]
        %v329 = vld [vmem:[#allocation8 + $0x78] sm:$0xff]
        %v330 = vld [vmem:[#allocation8 + $0x80] sm:$0xff]
        %v331 = vld [vmem:[#allocation8 + $0x88] sm:$0xff]
        %v332 = vld [vmem:[#allocation8 + $0x90] sm:$0xff]
        %v333 = vld [vmem:[#allocation8 + $0x98] sm:$0xff]
        %v334 = vld [vmem:[#allocation8 + $0xa0] sm:$0xff]
        %v335 = vld [vmem:[#allocation8 + $0xa8] sm:$0xff]
        %v336 = vld [vmem:[#allocation8 + $0xb0] sm:$0xff]
        %v337 = vld [vmem:[#allocation8 + $0xb8] sm:$0xff]
        %v338 = vld [vmem:[#allocation8 + $0xc0] sm:$0xff]
        %v339 = vld [vmem:[#allocation8 + $0xc8] sm:$0xff]
        %v340 = vld [vmem:[#allocation8 + $0xd0] sm:$0xff]
        %v341 = vld [vmem:[#allocation8 + $0xd8] sm:$0xff]
        %v342 = vld [vmem:[#allocation8 + $0xe0] sm:$0xff]
        %v343 = vld [vmem:[#allocation8 + $0xe8] sm:$0xff]
        %v344 = vld [vmem:[#allocation8 + $0xf0] sm:$0xff]
        %v345 = vld [vmem:[#allocation8 + $0xf8] sm:$0xff]
        %v346 = vld [vmem:[#allocation8 + $0x100] sm:$0xff]
        %v347 = vld [vmem:[#allocation8 + $0x108] sm:$0xff]
        %v348 = vld [vmem:[#allocation8 + $0x110] sm:$0xff]
        %v349 = vld [vmem:[#allocation8 + $0x118] sm:$0xff]
        %v350 = vld [vmem:[#allocation8 + $0x120] sm:$0xff]
        %v351 = vld [vmem:[#allocation8 + $0x128] sm:$0xff]
        %v352 = vld [vmem:[#allocation8 + $0x130] sm:$0xff]
        %v353 = vld [vmem:[#allocation8 + $0x138] sm:$0xff]
        %v354 = vld [vmem:[#allocation8 + $0x140] sm:$0xff]
        %v355 = vld [vmem:[#allocation8 + $0x148] sm:$0xff]
        %v356 = vld [vmem:[#allocation8 + $0x150] sm:$0xff]
        %v357 = vld [vmem:[#allocation8 + $0x158] sm:$0xff]
        %v358 = vld [vmem:[#allocation8 + $0x160] sm:$0xff]
        %v359 = vld [vmem:[#allocation8 + $0x168] sm:$0xff]
        %v360 = vld [vmem:[#allocation8 + $0x170] sm:$0xff]
        %v361 = vld [vmem:[#allocation8 + $0x178] sm:$0xff]
        %v362 = vld [vmem:[#allocation8 + $0x180] sm:$0xff]
        %v363 = vld [vmem:[#allocation8 + $0x188] sm:$0xff]
        %v364 = vld [vmem:[#allocation8 + $0x190] sm:$0xff]
        %v365 = vld [vmem:[#allocation8 + $0x198] sm:$0xff]
        %v366 = vld [vmem:[#allocation8 + $0x1a0] sm:$0xff]
        %v367 = vld [vmem:[#allocation8 + $0x1a8] sm:$0xff]
        %v368 = vld [vmem:[#allocation8 + $0x1b0] sm:$0xff]
        %v369 = vld [vmem:[#allocation8 + $0x1b8] sm:$0xff]
        %v370 = vld [vmem:[#allocation8 + $0x1c0] sm:$0xff]
        %v371 = vld [vmem:[#allocation8 + $0x1c8] sm:$0xff]
        %v372 = vld [vmem:[#allocation8 + $0x1d0] sm:$0xff]
        %v373 = vld [vmem:[#allocation8 + $0x1d8] sm:$0xff]
        %v374 = vld [vmem:[#allocation8 + $0x1e0] sm:$0xff]
        %v375 = vld [vmem:[#allocation8 + $0x1e8] sm:$0xff]
        %v376 = vld [vmem:[#allocation8 + $0x1f0] sm:$0xff]
        %v377 = vld [vmem:[#allocation8 + $0x1f8] sm:$0xff]
        %v378 = vld [vmem:[#allocation8 + $0x200] sm:$0xff]
        %v379 = vld [vmem:[#allocation8 + $0x208] sm:$0xff]
        %v380 = vld [vmem:[#allocation8 + $0x210] sm:$0xff]
        %v381 = vld [vmem:[#allocation8 + $0x218] sm:$0xff]
        %v382 = vld [vmem:[#allocation8 + $0x220] sm:$0xff]
        %v383 = vld [vmem:[#allocation8 + $0x228] sm:$0xff]
        %v384 = vld [vmem:[#allocation8 + $0x230] sm:$0xff]
        %v385 = vld [vmem:[#allocation8 + $0x238] sm:$0xff]
        %v386 = vld [vmem:[#allocation8 + $0x240] sm:$0xff]
        %v387 = vld [vmem:[#allocation8 + $0x248] sm:$0xff]
        %v388 = vld [vmem:[#allocation8 + $0x250] sm:$0xff]
        %v389 = vld [vmem:[#allocation8 + $0x258] sm:$0xff]
        %v390 = vld [vmem:[#allocation8 + $0x260] sm:$0xff]
        %v391 = vld [vmem:[#allocation8 + $0x268] sm:$0xff]
        %v392 = vld [vmem:[#allocation8 + $0x270] sm:$0xff]
        %v393 = vld [vmem:[#allocation8 + $0x278] sm:$0xff]
        %v394 = vld [vmem:[#allocation8 + $0x280] sm:$0xff]
        %v395 = vld [vmem:[#allocation8 + $0x288] sm:$0xff]
        %v396 = vld [vmem:[#allocation8 + $0x290] sm:$0xff]
        %v397 = vld [vmem:[#allocation8 + $0x298] sm:$0xff]
        %v398 = vld [vmem:[#allocation8 + $0x2a0] sm:$0xff]
        %v399 = vld [vmem:[#allocation8 + $0x2a8] sm:$0xff]
        %v400 = vld [vmem:[#allocation8 + $0x2b0] sm:$0xff]
        %v401 = vld [vmem:[#allocation8 + $0x2b8] sm:$0xff]
        %v402 = vld [vmem:[#allocation8 + $0x2c0] sm:$0xff]
        %v403 = vld [vmem:[#allocation8 + $0x2c8] sm:$0xff]
        %v404 = vld [vmem:[#allocation8 + $0x2d0] sm:$0xff]
        %v405 = vld [vmem:[#allocation8 + $0x2d8] sm:$0xff]
        %v406 = vld [vmem:[#allocation8 + $0x2e0] sm:$0xff]
        %v407 = vld [vmem:[#allocation8 + $0x2e8] sm:$0xff]
        %v408 = vld [vmem:[#allocation8 + $0x2f0] sm:$0xff]
        %v409 = vld [vmem:[#allocation8 + $0x2f8] sm:$0xff]
        %v410 = vld [vmem:[#allocation8 + $0x300] sm:$0xff]
        %v411 = vld [vmem:[#allocation8 + $0x308] sm:$0xff]
        %v412 = vld [vmem:[#allocation8 + $0x310] sm:$0xff]
        %v413 = vld [vmem:[#allocation8 + $0x318] sm:$0xff]
        %v414 = vld [vmem:[#allocation8 + $0x320] sm:$0xff]
        %v415 = vld [vmem:[#allocation8 + $0x328] sm:$0xff]
        %v416 = vld [vmem:[#allocation8 + $0x330] sm:$0xff]
        %v417 = vld [vmem:[#allocation8 + $0x338] sm:$0xff]
        %v418 = vld [vmem:[#allocation8 + $0x340] sm:$0xff]
        %v419 = vld [vmem:[#allocation8 + $0x348] sm:$0xff]
        %v420 = vld [vmem:[#allocation8 + $0x350] sm:$0xff]
        %v421 = vld [vmem:[#allocation8 + $0x358] sm:$0xff]
        %v422 = vld [vmem:[#allocation8 + $0x360] sm:$0xff]
        %v423 = vld [vmem:[#allocation8 + $0x368] sm:$0xff]
        %v424 = vld [vmem:[#allocation8 + $0x370] sm:$0xff]
        %v425 = vld [vmem:[#allocation8 + $0x378] sm:$0xff]
        %v426 = vld [vmem:[#allocation8 + $0x380] sm:$0xff]
        %v427 = vld [vmem:[#allocation8 + $0x388] sm:$0xff]
        %v428 = vld [vmem:[#allocation8 + $0x390] sm:$0xff]
        %v429 = vld [vmem:[#allocation8 + $0x398] sm:$0xff]
        %v430 = vld [vmem:[#allocation8 + $0x3a0] sm:$0xff]
        %v431 = vld [vmem:[#allocation8 + $0x3a8] sm:$0xff]
        %v432 = vld [vmem:[#allocation8 + $0x3b0] sm:$0xff]
        %v433 = vld [vmem:[#allocation8 + $0x3b8] sm:$0xff]
        %v434 = vld [vmem:[#allocation8 + $0x3c0] sm:$0xff]
        %v435 = vld [vmem:[#allocation8 + $0x3c8] sm:$0xff]
        %v436 = vld [vmem:[#allocation8 + $0x3d0] sm:$0xff]
        %v437 = vld [vmem:[#allocation8 + $0x3d8] sm:$0xff]
        %v438 = vld [vmem:[#allocation8 + $0x3e0] sm:$0xff]
        %v439 = vld [vmem:[#allocation8 + $0x3e8] sm:$0xff]
        %v440 = vld [vmem:[#allocation8 + $0x3f0] sm:$0xff]
        %v441 = vld [vmem:[#allocation8 + $0x3f8] sm:$0xff]
        %v442 = vld [vmem:[#allocation8 + $0x400] sm:$0xff]
        %v443 = vld [vmem:[#allocation8 + $0x408] sm:$0xff]
        %v444 = vld [vmem:[#allocation8 + $0x410] sm:$0xff]
        %v445 = vld [vmem:[#allocation8 + $0x418] sm:$0xff]
        %v446 = vld [vmem:[#allocation8 + $0x420] sm:$0xff]
        %v447 = vld [vmem:[#allocation8 + $0x428] sm:$0xff]
        %v448 = vld [vmem:[#allocation8 + $0x430] sm:$0xff]
        %v449 = vld [vmem:[#allocation8 + $0x438] sm:$0xff]
        %v450 = vld [vmem:[#allocation8 + $0x440] sm:$0xff]
        %v451 = vld [vmem:[#allocation8 + $0x448] sm:$0xff]
        %v452 = vld [vmem:[#allocation8 + $0x450] sm:$0xff]
        %v453 = vld [vmem:[#allocation8 + $0x458] sm:$0xff]
        %v454 = vld [vmem:[#allocation8 + $0x460] sm:$0xff]
        %v455 = vld [vmem:[#allocation8 + $0x468] sm:$0xff]
        %v456 = vld [vmem:[#allocation8 + $0x470] sm:$0xff]
        %v457 = vld [vmem:[#allocation8 + $0x478] sm:$0xff]
        %v458 = vld [vmem:[#allocation8 + $0x480] sm:$0xff]
        %v459 = vld [vmem:[#allocation8 + $0x488] sm:$0xff]
        %v460 = vld [vmem:[#allocation8 + $0x490] sm:$0xff]
        %v461 = vld [vmem:[#allocation8 + $0x498] sm:$0xff]
        %v462 = vld [vmem:[#allocation8 + $0x4a0] sm:$0xff]
        %v463 = vld [vmem:[#allocation8 + $0x4a8] sm:$0xff]
        %v464 = vld [vmem:[#allocation8 + $0x4b0] sm:$0xff]
        %v465 = vld [vmem:[#allocation8 + $0x4b8] sm:$0xff]
        %v466 = vld [vmem:[#allocation8 + $0x4c0] sm:$0xff]
        %v467 = vld [vmem:[#allocation8 + $0x4c8] sm:$0xff]
        %v468 = vld [vmem:[#allocation8 + $0x4d0] sm:$0xff]
        %v469 = vld [vmem:[#allocation8 + $0x4d8] sm:$0xff]
        %v470 = vld [vmem:[#allocation8 + $0x4e0] sm:$0xff]
        %v471 = vld [vmem:[#allocation8 + $0x4e8] sm:$0xff]
        %v472 = vld [vmem:[#allocation8 + $0x4f0] sm:$0xff]
        %v473 = vld [vmem:[#allocation8 + $0x4f8] sm:$0xff]
        %v474 = vld [vmem:[#allocation8 + $0x500] sm:$0xff]
        %v475 = vld [vmem:[#allocation8 + $0x508] sm:$0xff]
        %v476 = vld [vmem:[#allocation8 + $0x510] sm:$0xff]
        %v477 = vld [vmem:[#allocation8 + $0x518] sm:$0xff]
        %v478 = vld [vmem:[#allocation8 + $0x520] sm:$0xff]
        %v479 = vld [vmem:[#allocation8 + $0x528] sm:$0xff]
        %v480 = vld [vmem:[#allocation8 + $0x530] sm:$0xff]
        %v481 = vld [vmem:[#allocation8 + $0x538] sm:$0xff]
        %v482 = vld [vmem:[#allocation8 + $0x540] sm:$0xff]
        %v483 = vld [vmem:[#allocation8 + $0x548] sm:$0xff]
        %v484 = vld [vmem:[#allocation8 + $0x550] sm:$0xff]
        %v485 = vld [vmem:[#allocation8 + $0x558] sm:$0xff]
        %v486 = vld [vmem:[#allocation8 + $0x560] sm:$0xff]
        %v487 = vld [vmem:[#allocation8 + $0x568] sm:$0xff]
        %v488 = vld [vmem:[#allocation8 + $0x570] sm:$0xff]
        %v489 = vld [vmem:[#allocation8 + $0x578] sm:$0xff]
        %v490 = vld [vmem:[#allocation8 + $0x580] sm:$0xff]
        %v491 = vld [vmem:[#allocation8 + $0x588] sm:$0xff]
        %v492 = vld [vmem:[#allocation8 + $0x590] sm:$0xff]
        %v493 = vld [vmem:[#allocation8 + $0x598] sm:$0xff]
        %v494 = vld [vmem:[#allocation8 + $0x5a0] sm:$0xff]
        %v495 = vld [vmem:[#allocation8 + $0x5a8] sm:$0xff]
        %v496 = vld [vmem:[#allocation8 + $0x5b0] sm:$0xff]
        %v497 = vld [vmem:[#allocation8 + $0x5b8] sm:$0xff]
        %v498 = vld [vmem:[#allocation8 + $0x5c0] sm:$0xff]
        %v499 = vld [vmem:[#allocation8 + $0x5c8] sm:$0xff]
        %v500 = vld [vmem:[#allocation8 + $0x5d0] sm:$0xff]
        %v501 = vld [vmem:[#allocation8 + $0x5d8] sm:$0xff]
        %v502 = vld [vmem:[#allocation8 + $0x5e0] sm:$0xff]
        %v503 = vld [vmem:[#allocation8 + $0x5e8] sm:$0xff]
        %v504 = vld [vmem:[#allocation8 + $0x5f0] sm:$0xff]
        %v505 = vld [vmem:[#allocation8 + $0x5f8] sm:$0xff]
        %v506 = vld [vmem:[#allocation8 + $0x600] sm:$0xff]
        %v507 = vld [vmem:[#allocation8 + $0x608] sm:$0xff]
        %v508 = vld [vmem:[#allocation8 + $0x610] sm:$0xff]
        %v509 = vld [vmem:[#allocation8 + $0x618] sm:$0xff]
        %v510 = vld [vmem:[#allocation8 + $0x620] sm:$0xff]
        %v511 = vld [vmem:[#allocation8 + $0x628] sm:$0xff]
        %v512 = vld [vmem:[#allocation8 + $0x630] sm:$0xff]
        %v513 = vld [vmem:[#allocation8 + $0x638] sm:$0xff]
        %v514 = vld [vmem:[#allocation8 + $0x640] sm:$0xff]
        %v515 = vld [vmem:[#allocation8 + $0x648] sm:$0xff]
        %v516 = vld [vmem:[#allocation8 + $0x650] sm:$0xff]
        %v517 = vld [vmem:[#allocation8 + $0x658] sm:$0xff]
        %v518 = vld [vmem:[#allocation8 + $0x660] sm:$0xff]
        %v519 = vld [vmem:[#allocation8 + $0x668] sm:$0xff]
        %v520 = vld [vmem:[#allocation8 + $0x670] sm:$0xff]
        %v521 = vld [vmem:[#allocation8 + $0x678] sm:$0xff]
        %v522 = vld [vmem:[#allocation8 + $0x680] sm:$0xff]
        %v523 = vld [vmem:[#allocation8 + $0x688] sm:$0xff]
        %v524 = vld [vmem:[#allocation8 + $0x690] sm:$0xff]
        %v525 = vld [vmem:[#allocation8 + $0x698] sm:$0xff]
        %v526 = vld [vmem:[#allocation8 + $0x6a0] sm:$0xff]
        %v527 = vld [vmem:[#allocation8 + $0x6a8] sm:$0xff]
        %v528 = vld [vmem:[#allocation8 + $0x6b0] sm:$0xff]
        %v529 = vld [vmem:[#allocation8 + $0x6b8] sm:$0xff]
        %v530 = vld [vmem:[#allocation8 + $0x6c0] sm:$0xff]
        %v531 = vld [vmem:[#allocation8 + $0x6c8] sm:$0xff]
        %v532 = vld [vmem:[#allocation8 + $0x6d0] sm:$0xff]
        %v533 = vld [vmem:[#allocation8 + $0x6d8] sm:$0xff]
        %v534 = vld [vmem:[#allocation8 + $0x6e0] sm:$0xff]
        %v535 = vld [vmem:[#allocation8 + $0x6e8] sm:$0xff]
        %v536 = vld [vmem:[#allocation8 + $0x6f0] sm:$0xff]
        %v537 = vld [vmem:[#allocation8 + $0x6f8] sm:$0xff]
        %v538 = vld [vmem:[#allocation8 + $0x700] sm:$0xff]
        %v539 = vld [vmem:[#allocation8 + $0x708] sm:$0xff]
        %v540 = vld [vmem:[#allocation8 + $0x710] sm:$0xff]
        %v541 = vld [vmem:[#allocation8 + $0x718] sm:$0xff]
        %v542 = vld [vmem:[#allocation8 + $0x720] sm:$0xff]
        %v543 = vld [vmem:[#allocation8 + $0x728] sm:$0xff]
        %v544 = vld [vmem:[#allocation8 + $0x730] sm:$0xff]
        %v545 = vld [vmem:[#allocation8 + $0x738] sm:$0xff]
        %v546 = vld [vmem:[#allocation8 + $0x740] sm:$0xff]
        %v547 = vld [vmem:[#allocation8 + $0x748] sm:$0xff]
        %v548 = vld [vmem:[#allocation8 + $0x750] sm:$0xff]
        %v549 = vld [vmem:[#allocation8 + $0x758] sm:$0xff]
        %v550 = vld [vmem:[#allocation8 + $0x760] sm:$0xff]
        %v551 = vld [vmem:[#allocation8 + $0x768] sm:$0xff]
        %v552 = vld [vmem:[#allocation8 + $0x770] sm:$0xff]
        %v553 = vld [vmem:[#allocation8 + $0x778] sm:$0xff]
        %v554 = vld [vmem:[#allocation8 + $0x780] sm:$0xff]
        %v555 = vld [vmem:[#allocation8 + $0x788] sm:$0xff]
        %v556 = vld [vmem:[#allocation8 + $0x790] sm:$0xff]
        %v557 = vld [vmem:[#allocation8 + $0x798] sm:$0xff]
        %v558 = vld [vmem:[#allocation8 + $0x7a0] sm:$0xff]
        %v559 = vld [vmem:[#allocation8 + $0x7a8] sm:$0xff]
        %v560 = vld [vmem:[#allocation8 + $0x7b0] sm:$0xff]
        %v561 = vld [vmem:[#allocation8 + $0x7b8] sm:$0xff]
        %v562 = vld [vmem:[#allocation8 + $0x7c0] sm:$0xff]
        %v563 = vld [vmem:[#allocation8 + $0x7c8] sm:$0xff]
        %v564 = vld [vmem:[#allocation8 + $0x7d0] sm:$0xff]
        %v565 = vld [vmem:[#allocation8 + $0x7d8] sm:$0xff]
        %v566 = vld [vmem:[#allocation8 + $0x7e0] sm:$0xff]
        %v567 = vld [vmem:[#allocation8 + $0x7e8] sm:$0xff]
        %v568 = vld [vmem:[#allocation8 + $0x7f0] sm:$0xff]
        %v569 = vld [vmem:[#allocation8 + $0x7f8] sm:$0xff]
        %v826 = vunpack.c.l.b16 %v314
        %v827 = vunpack.c.h.b16 %v314
        %v828 = vunpack.c.l.b16 %v315
        %v829 = vunpack.c.h.b16 %v315
        %v830 = vunpack.c.l.b16 %v316
        %v831 = vunpack.c.h.b16 %v316
        %v832 = vunpack.c.l.b16 %v317
        %v833 = vunpack.c.h.b16 %v317
        %v834 = vunpack.c.l.b16 %v318
        %v835 = vunpack.c.h.b16 %v318
        %v836 = vunpack.c.l.b16 %v319
        %v837 = vunpack.c.h.b16 %v319
        %v838 = vunpack.c.l.b16 %v320
        %v839 = vunpack.c.h.b16 %v320
        %v840 = vunpack.c.l.b16 %v321
        %v841 = vunpack.c.h.b16 %v321
        %v842 = vunpack.c.l.b16 %v322
        %v843 = vunpack.c.h.b16 %v322
        %v844 = vunpack.c.l.b16 %v323
        %v845 = vunpack.c.h.b16 %v323
        %v846 = vunpack.c.l.b16 %v324
        %v847 = vunpack.c.h.b16 %v324
        %v848 = vunpack.c.l.b16 %v325
        %v849 = vunpack.c.h.b16 %v325
        %v850 = vunpack.c.l.b16 %v326
        %v851 = vunpack.c.h.b16 %v326
        %v852 = vunpack.c.l.b16 %v327
        %v853 = vunpack.c.h.b16 %v327
        %v854 = vunpack.c.l.b16 %v328
        %v855 = vunpack.c.h.b16 %v328
        %v856 = vunpack.c.l.b16 %v329
        %v857 = vunpack.c.h.b16 %v329
        %v858 = vunpack.c.l.b16 %v330
        %v859 = vunpack.c.h.b16 %v330
        %v860 = vunpack.c.l.b16 %v331
        %v861 = vunpack.c.h.b16 %v331
        %v862 = vunpack.c.l.b16 %v332
        %v863 = vunpack.c.h.b16 %v332
        %v864 = vunpack.c.l.b16 %v333
        %v865 = vunpack.c.h.b16 %v333
        %v866 = vunpack.c.l.b16 %v334
        %v867 = vunpack.c.h.b16 %v334
        %v868 = vunpack.c.l.b16 %v335
        %v869 = vunpack.c.h.b16 %v335
        %v870 = vunpack.c.l.b16 %v336
        %v871 = vunpack.c.h.b16 %v336
        %v872 = vunpack.c.l.b16 %v337
        %v873 = vunpack.c.h.b16 %v337
        %v874 = vunpack.c.l.b16 %v338
        %v875 = vunpack.c.h.b16 %v338
        %v876 = vunpack.c.l.b16 %v339
        %v877 = vunpack.c.h.b16 %v339
        %v878 = vunpack.c.l.b16 %v340
        %v879 = vunpack.c.h.b16 %v340
        %v880 = vunpack.c.l.b16 %v341
        %v881 = vunpack.c.h.b16 %v341
        %v882 = vunpack.c.l.b16 %v342
        %v883 = vunpack.c.h.b16 %v342
        %v884 = vunpack.c.l.b16 %v343
        %v885 = vunpack.c.h.b16 %v343
        %v886 = vunpack.c.l.b16 %v344
        %v887 = vunpack.c.h.b16 %v344
        %v888 = vunpack.c.l.b16 %v345
        %v889 = vunpack.c.h.b16 %v345
        %v890 = vunpack.c.l.b16 %v346
        %v891 = vunpack.c.h.b16 %v346
        %v892 = vunpack.c.l.b16 %v347
        %v893 = vunpack.c.h.b16 %v347
        %v894 = vunpack.c.l.b16 %v348
        %v895 = vunpack.c.h.b16 %v348
        %v896 = vunpack.c.l.b16 %v349
        %v897 = vunpack.c.h.b16 %v349
        %v898 = vunpack.c.l.b16 %v350
        %v899 = vunpack.c.h.b16 %v350
        %v900 = vunpack.c.l.b16 %v351
        %v901 = vunpack.c.h.b16 %v351
        %v902 = vunpack.c.l.b16 %v352
        %v903 = vunpack.c.h.b16 %v352
        %v904 = vunpack.c.l.b16 %v353
        %v905 = vunpack.c.h.b16 %v353
        %v906 = vunpack.c.l.b16 %v354
        %v907 = vunpack.c.h.b16 %v354
        %v908 = vunpack.c.l.b16 %v355
        %v909 = vunpack.c.h.b16 %v355
        %v910 = vunpack.c.l.b16 %v356
        %v911 = vunpack.c.h.b16 %v356
        %v912 = vunpack.c.l.b16 %v357
        %v913 = vunpack.c.h.b16 %v357
        %v914 = vunpack.c.l.b16 %v358
        %v915 = vunpack.c.h.b16 %v358
        %v916 = vunpack.c.l.b16 %v359
        %v917 = vunpack.c.h.b16 %v359
        %v918 = vunpack.c.l.b16 %v360
        %v919 = vunpack.c.h.b16 %v360
        %v920 = vunpack.c.l.b16 %v361
        %v921 = vunpack.c.h.b16 %v361
        %v922 = vunpack.c.l.b16 %v362
        %v923 = vunpack.c.h.b16 %v362
        %v924 = vunpack.c.l.b16 %v363
        %v925 = vunpack.c.h.b16 %v363
        %v926 = vunpack.c.l.b16 %v364
        %v927 = vunpack.c.h.b16 %v364
        %v928 = vunpack.c.l.b16 %v365
        %v929 = vunpack.c.h.b16 %v365
        %v930 = vunpack.c.l.b16 %v366
        %v931 = vunpack.c.h.b16 %v366
        %v932 = vunpack.c.l.b16 %v367
        %v933 = vunpack.c.h.b16 %v367
        %v934 = vunpack.c.l.b16 %v368
        %v935 = vunpack.c.h.b16 %v368
        %v936 = vunpack.c.l.b16 %v369
        %v937 = vunpack.c.h.b16 %v369
        %v938 = vunpack.c.l.b16 %v370
        %v939 = vunpack.c.h.b16 %v370
        %v940 = vunpack.c.l.b16 %v371
        %v941 = vunpack.c.h.b16 %v371
        %v942 = vunpack.c.l.b16 %v372
        %v943 = vunpack.c.h.b16 %v372
        %v944 = vunpack.c.l.b16 %v373
        %v945 = vunpack.c.h.b16 %v373
        %v946 = vunpack.c.l.b16 %v374
        %v947 = vunpack.c.h.b16 %v374
        %v948 = vunpack.c.l.b16 %v375
        %v949 = vunpack.c.h.b16 %v375
        %v950 = vunpack.c.l.b16 %v376
        %v951 = vunpack.c.h.b16 %v376
        %v952 = vunpack.c.l.b16 %v377
        %v953 = vunpack.c.h.b16 %v377
        %v954 = vunpack.c.l.b16 %v378
        %v955 = vunpack.c.h.b16 %v378
        %v956 = vunpack.c.l.b16 %v379
        %v957 = vunpack.c.h.b16 %v379
        %v958 = vunpack.c.l.b16 %v380
        %v959 = vunpack.c.h.b16 %v380
        %v960 = vunpack.c.l.b16 %v381
        %v961 = vunpack.c.h.b16 %v381
        %v962 = vunpack.c.l.b16 %v382
        %v963 = vunpack.c.h.b16 %v382
        %v964 = vunpack.c.l.b16 %v383
        %v965 = vunpack.c.h.b16 %v383
        %v966 = vunpack.c.l.b16 %v384
        %v967 = vunpack.c.h.b16 %v384
        %v968 = vunpack.c.l.b16 %v385
        %v969 = vunpack.c.h.b16 %v385
        %v970 = vunpack.c.l.b16 %v386
        %v971 = vunpack.c.h.b16 %v386
        %v972 = vunpack.c.l.b16 %v387
        %v973 = vunpack.c.h.b16 %v387
        %v974 = vunpack.c.l.b16 %v388
        %v975 = vunpack.c.h.b16 %v388
        %v976 = vunpack.c.l.b16 %v389
        %v977 = vunpack.c.h.b16 %v389
        %v978 = vunpack.c.l.b16 %v390
        %v979 = vunpack.c.h.b16 %v390
        %v980 = vunpack.c.l.b16 %v391
        %v981 = vunpack.c.h.b16 %v391
        %v982 = vunpack.c.l.b16 %v392
        %v983 = vunpack.c.h.b16 %v392
        %v984 = vunpack.c.l.b16 %v393
        %v985 = vunpack.c.h.b16 %v393
        %v986 = vunpack.c.l.b16 %v394
        %v987 = vunpack.c.h.b16 %v394
        %v988 = vunpack.c.l.b16 %v395
        %v989 = vunpack.c.h.b16 %v395
        %v990 = vunpack.c.l.b16 %v396
        %v991 = vunpack.c.h.b16 %v396
        %v992 = vunpack.c.l.b16 %v397
        %v993 = vunpack.c.h.b16 %v397
        %v994 = vunpack.c.l.b16 %v398
        %v995 = vunpack.c.h.b16 %v398
        %v996 = vunpack.c.l.b16 %v399
        %v997 = vunpack.c.h.b16 %v399
        %v998 = vunpack.c.l.b16 %v400
        %v999 = vunpack.c.h.b16 %v400
        %v1000 = vunpack.c.l.b16 %v401
        %v1001 = vunpack.c.h.b16 %v401
        %v1002 = vunpack.c.l.b16 %v402
        %v1003 = vunpack.c.h.b16 %v402
        %v1004 = vunpack.c.l.b16 %v403
        %v1005 = vunpack.c.h.b16 %v403
        %v1006 = vunpack.c.l.b16 %v404
        %v1007 = vunpack.c.h.b16 %v404
        %v1008 = vunpack.c.l.b16 %v405
        %v1009 = vunpack.c.h.b16 %v405
        %v1010 = vunpack.c.l.b16 %v406
        %v1011 = vunpack.c.h.b16 %v406
        %v1012 = vunpack.c.l.b16 %v407
        %v1013 = vunpack.c.h.b16 %v407
        %v1014 = vunpack.c.l.b16 %v408
        %v1015 = vunpack.c.h.b16 %v408
        %v1016 = vunpack.c.l.b16 %v409
        %v1017 = vunpack.c.h.b16 %v409
        %v1018 = vunpack.c.l.b16 %v410
        %v1019 = vunpack.c.h.b16 %v410
        %v1020 = vunpack.c.l.b16 %v411
        %v1021 = vunpack.c.h.b16 %v411
        %v1022 = vunpack.c.l.b16 %v412
        %v1023 = vunpack.c.h.b16 %v412
        %v1024 = vunpack.c.l.b16 %v413
        %v1025 = vunpack.c.h.b16 %v413
        %v1026 = vunpack.c.l.b16 %v414
        %v1027 = vunpack.c.h.b16 %v414
        %v1028 = vunpack.c.l.b16 %v415
        %v1029 = vunpack.c.h.b16 %v415
        %v1030 = vunpack.c.l.b16 %v416
        %v1031 = vunpack.c.h.b16 %v416
        %v1032 = vunpack.c.l.b16 %v417
        %v1033 = vunpack.c.h.b16 %v417
        %v1034 = vunpack.c.l.b16 %v418
        %v1035 = vunpack.c.h.b16 %v418
        %v1036 = vunpack.c.l.b16 %v419
        %v1037 = vunpack.c.h.b16 %v419
        %v1038 = vunpack.c.l.b16 %v420
        %v1039 = vunpack.c.h.b16 %v420
        %v1040 = vunpack.c.l.b16 %v421
        %v1041 = vunpack.c.h.b16 %v421
        %v1042 = vunpack.c.l.b16 %v422
        %v1043 = vunpack.c.h.b16 %v422
        %v1044 = vunpack.c.l.b16 %v423
        %v1045 = vunpack.c.h.b16 %v423
        %v1046 = vunpack.c.l.b16 %v424
        %v1047 = vunpack.c.h.b16 %v424
        %v1048 = vunpack.c.l.b16 %v425
        %v1049 = vunpack.c.h.b16 %v425
        %v1050 = vunpack.c.l.b16 %v426
        %v1051 = vunpack.c.h.b16 %v426
        %v1052 = vunpack.c.l.b16 %v427
        %v1053 = vunpack.c.h.b16 %v427
        %v1054 = vunpack.c.l.b16 %v428
        %v1055 = vunpack.c.h.b16 %v428
        %v1056 = vunpack.c.l.b16 %v429
        %v1057 = vunpack.c.h.b16 %v429
        %v1058 = vunpack.c.l.b16 %v430
        %v1059 = vunpack.c.h.b16 %v430
        %v1060 = vunpack.c.l.b16 %v431
        %v1061 = vunpack.c.h.b16 %v431
        %v1062 = vunpack.c.l.b16 %v432
        %v1063 = vunpack.c.h.b16 %v432
        %v1064 = vunpack.c.l.b16 %v433
        %v1065 = vunpack.c.h.b16 %v433
        %v1066 = vunpack.c.l.b16 %v434
        %v1067 = vunpack.c.h.b16 %v434
        %v1068 = vunpack.c.l.b16 %v435
        %v1069 = vunpack.c.h.b16 %v435
        %v1070 = vunpack.c.l.b16 %v436
        %v1071 = vunpack.c.h.b16 %v436
        %v1072 = vunpack.c.l.b16 %v437
        %v1073 = vunpack.c.h.b16 %v437
        %v1074 = vunpack.c.l.b16 %v438
        %v1075 = vunpack.c.h.b16 %v438
        %v1076 = vunpack.c.l.b16 %v439
        %v1077 = vunpack.c.h.b16 %v439
        %v1078 = vunpack.c.l.b16 %v440
        %v1079 = vunpack.c.h.b16 %v440
        %v1080 = vunpack.c.l.b16 %v441
        %v1081 = vunpack.c.h.b16 %v441
        %v1082 = vunpack.c.l.b16 %v442
        %v1083 = vunpack.c.h.b16 %v442
        %v1084 = vunpack.c.l.b16 %v443
        %v1085 = vunpack.c.h.b16 %v443
        %v1086 = vunpack.c.l.b16 %v444
        %v1087 = vunpack.c.h.b16 %v444
        %v1088 = vunpack.c.l.b16 %v445
        %v1089 = vunpack.c.h.b16 %v445
        %v1090 = vunpack.c.l.b16 %v446
        %v1091 = vunpack.c.h.b16 %v446
        %v1092 = vunpack.c.l.b16 %v447
        %v1093 = vunpack.c.h.b16 %v447
        %v1094 = vunpack.c.l.b16 %v448
        %v1095 = vunpack.c.h.b16 %v448
        %v1096 = vunpack.c.l.b16 %v449
        %v1097 = vunpack.c.h.b16 %v449
        %v1098 = vunpack.c.l.b16 %v450
        %v1099 = vunpack.c.h.b16 %v450
        %v1100 = vunpack.c.l.b16 %v451
        %v1101 = vunpack.c.h.b16 %v451
        %v1102 = vunpack.c.l.b16 %v452
        %v1103 = vunpack.c.h.b16 %v452
        %v1104 = vunpack.c.l.b16 %v453
        %v1105 = vunpack.c.h.b16 %v453
        %v1106 = vunpack.c.l.b16 %v454
        %v1107 = vunpack.c.h.b16 %v454
        %v1108 = vunpack.c.l.b16 %v455
        %v1109 = vunpack.c.h.b16 %v455
        %v1110 = vunpack.c.l.b16 %v456
        %v1111 = vunpack.c.h.b16 %v456
        %v1112 = vunpack.c.l.b16 %v457
        %v1113 = vunpack.c.h.b16 %v457
        %v1114 = vunpack.c.l.b16 %v458
        %v1115 = vunpack.c.h.b16 %v458
        %v1116 = vunpack.c.l.b16 %v459
        %v1117 = vunpack.c.h.b16 %v459
        %v1118 = vunpack.c.l.b16 %v460
        %v1119 = vunpack.c.h.b16 %v460
        %v1120 = vunpack.c.l.b16 %v461
        %v1121 = vunpack.c.h.b16 %v461
        %v1122 = vunpack.c.l.b16 %v462
        %v1123 = vunpack.c.h.b16 %v462
        %v1124 = vunpack.c.l.b16 %v463
        %v1125 = vunpack.c.h.b16 %v463
        %v1126 = vunpack.c.l.b16 %v464
        %v1127 = vunpack.c.h.b16 %v464
        %v1128 = vunpack.c.l.b16 %v465
        %v1129 = vunpack.c.h.b16 %v465
        %v1130 = vunpack.c.l.b16 %v466
        %v1131 = vunpack.c.h.b16 %v466
        %v1132 = vunpack.c.l.b16 %v467
        %v1133 = vunpack.c.h.b16 %v467
        %v1134 = vunpack.c.l.b16 %v468
        %v1135 = vunpack.c.h.b16 %v468
        %v1136 = vunpack.c.l.b16 %v469
        %v1137 = vunpack.c.h.b16 %v469
        %v1138 = vunpack.c.l.b16 %v470
        %v1139 = vunpack.c.h.b16 %v470
        %v1140 = vunpack.c.l.b16 %v471
        %v1141 = vunpack.c.h.b16 %v471
        %v1142 = vunpack.c.l.b16 %v472
        %v1143 = vunpack.c.h.b16 %v472
        %v1144 = vunpack.c.l.b16 %v473
        %v1145 = vunpack.c.h.b16 %v473
        %v1146 = vunpack.c.l.b16 %v474
        %v1147 = vunpack.c.h.b16 %v474
        %v1148 = vunpack.c.l.b16 %v475
        %v1149 = vunpack.c.h.b16 %v475
        %v1150 = vunpack.c.l.b16 %v476
        %v1151 = vunpack.c.h.b16 %v476
        %v1152 = vunpack.c.l.b16 %v477
        %v1153 = vunpack.c.h.b16 %v477
        %v1154 = vunpack.c.l.b16 %v478
        %v1155 = vunpack.c.h.b16 %v478
        %v1156 = vunpack.c.l.b16 %v479
        %v1157 = vunpack.c.h.b16 %v479
        %v1158 = vunpack.c.l.b16 %v480
        %v1159 = vunpack.c.h.b16 %v480
        %v1160 = vunpack.c.l.b16 %v481
        %v1161 = vunpack.c.h.b16 %v481
        %v1162 = vunpack.c.l.b16 %v482
        %v1163 = vunpack.c.h.b16 %v482
        %v1164 = vunpack.c.l.b16 %v483
        %v1165 = vunpack.c.h.b16 %v483
        %v1166 = vunpack.c.l.b16 %v484
        %v1167 = vunpack.c.h.b16 %v484
        %v1168 = vunpack.c.l.b16 %v485
        %v1169 = vunpack.c.h.b16 %v485
        %v1170 = vunpack.c.l.b16 %v486
        %v1171 = vunpack.c.h.b16 %v486
        %v1172 = vunpack.c.l.b16 %v487
        %v1173 = vunpack.c.h.b16 %v487
        %v1174 = vunpack.c.l.b16 %v488
        %v1175 = vunpack.c.h.b16 %v488
        %v1176 = vunpack.c.l.b16 %v489
        %v1177 = vunpack.c.h.b16 %v489
        %v1178 = vunpack.c.l.b16 %v490
        %v1179 = vunpack.c.h.b16 %v490
        %v1180 = vunpack.c.l.b16 %v491
        %v1181 = vunpack.c.h.b16 %v491
        %v1182 = vunpack.c.l.b16 %v492
        %v1183 = vunpack.c.h.b16 %v492
        %v1184 = vunpack.c.l.b16 %v493
        %v1185 = vunpack.c.h.b16 %v493
        %v1186 = vunpack.c.l.b16 %v494
        %v1187 = vunpack.c.h.b16 %v494
        %v1188 = vunpack.c.l.b16 %v495
        %v1189 = vunpack.c.h.b16 %v495
        %v1190 = vunpack.c.l.b16 %v496
        %v1191 = vunpack.c.h.b16 %v496
        %v1192 = vunpack.c.l.b16 %v497
        %v1193 = vunpack.c.h.b16 %v497
        %v1194 = vunpack.c.l.b16 %v498
        %v1195 = vunpack.c.h.b16 %v498
        %v1196 = vunpack.c.l.b16 %v499
        %v1197 = vunpack.c.h.b16 %v499
        %v1198 = vunpack.c.l.b16 %v500
        %v1199 = vunpack.c.h.b16 %v500
        %v1200 = vunpack.c.l.b16 %v501
        %v1201 = vunpack.c.h.b16 %v501
        %v1202 = vunpack.c.l.b16 %v502
        %v1203 = vunpack.c.h.b16 %v502
        %v1204 = vunpack.c.l.b16 %v503
        %v1205 = vunpack.c.h.b16 %v503
        %v1206 = vunpack.c.l.b16 %v504
        %v1207 = vunpack.c.h.b16 %v504
        %v1208 = vunpack.c.l.b16 %v505
        %v1209 = vunpack.c.h.b16 %v505
        %v1210 = vunpack.c.l.b16 %v506
        %v1211 = vunpack.c.h.b16 %v506
        %v1212 = vunpack.c.l.b16 %v507
        %v1213 = vunpack.c.h.b16 %v507
        %v1214 = vunpack.c.l.b16 %v508
        %v1215 = vunpack.c.h.b16 %v508
        %v1216 = vunpack.c.l.b16 %v509
        %v1217 = vunpack.c.h.b16 %v509
        %v1218 = vunpack.c.l.b16 %v510
        %v1219 = vunpack.c.h.b16 %v510
        %v1220 = vunpack.c.l.b16 %v511
        %v1221 = vunpack.c.h.b16 %v511
        %v1222 = vunpack.c.l.b16 %v512
        %v1223 = vunpack.c.h.b16 %v512
        %v1224 = vunpack.c.l.b16 %v513
        %v1225 = vunpack.c.h.b16 %v513
        %v1226 = vunpack.c.l.b16 %v514
        %v1227 = vunpack.c.h.b16 %v514
        %v1228 = vunpack.c.l.b16 %v515
        %v1229 = vunpack.c.h.b16 %v515
        %v1230 = vunpack.c.l.b16 %v516
        %v1231 = vunpack.c.h.b16 %v516
        %v1232 = vunpack.c.l.b16 %v517
        %v1233 = vunpack.c.h.b16 %v517
        %v1234 = vunpack.c.l.b16 %v518
        %v1235 = vunpack.c.h.b16 %v518
        %v1236 = vunpack.c.l.b16 %v519
        %v1237 = vunpack.c.h.b16 %v519
        %v1238 = vunpack.c.l.b16 %v520
        %v1239 = vunpack.c.h.b16 %v520
        %v1240 = vunpack.c.l.b16 %v521
        %v1241 = vunpack.c.h.b16 %v521
        %v1242 = vunpack.c.l.b16 %v522
        %v1243 = vunpack.c.h.b16 %v522
        %v1244 = vunpack.c.l.b16 %v523
        %v1245 = vunpack.c.h.b16 %v523
        %v1246 = vunpack.c.l.b16 %v524
        %v1247 = vunpack.c.h.b16 %v524
        %v1248 = vunpack.c.l.b16 %v525
        %v1249 = vunpack.c.h.b16 %v525
        %v1250 = vunpack.c.l.b16 %v526
        %v1251 = vunpack.c.h.b16 %v526
        %v1252 = vunpack.c.l.b16 %v527
        %v1253 = vunpack.c.h.b16 %v527
        %v1254 = vunpack.c.l.b16 %v528
        %v1255 = vunpack.c.h.b16 %v528
        %v1256 = vunpack.c.l.b16 %v529
        %v1257 = vunpack.c.h.b16 %v529
        %v1258 = vunpack.c.l.b16 %v530
        %v1259 = vunpack.c.h.b16 %v530
        %v1260 = vunpack.c.l.b16 %v531
        %v1261 = vunpack.c.h.b16 %v531
        %v1262 = vunpack.c.l.b16 %v532
        %v1263 = vunpack.c.h.b16 %v532
        %v1264 = vunpack.c.l.b16 %v533
        %v1265 = vunpack.c.h.b16 %v533
        %v1266 = vunpack.c.l.b16 %v534
        %v1267 = vunpack.c.h.b16 %v534
        %v1268 = vunpack.c.l.b16 %v535
        %v1269 = vunpack.c.h.b16 %v535
        %v1270 = vunpack.c.l.b16 %v536
        %v1271 = vunpack.c.h.b16 %v536
        %v1272 = vunpack.c.l.b16 %v537
        %v1273 = vunpack.c.h.b16 %v537
        %v1274 = vunpack.c.l.b16 %v538
        %v1275 = vunpack.c.h.b16 %v538
        %v1276 = vunpack.c.l.b16 %v539
        %v1277 = vunpack.c.h.b16 %v539
        %v1278 = vunpack.c.l.b16 %v540
        %v1279 = vunpack.c.h.b16 %v540
        %v1280 = vunpack.c.l.b16 %v541
        %v1281 = vunpack.c.h.b16 %v541
        %v1282 = vunpack.c.l.b16 %v542
        %v1283 = vunpack.c.h.b16 %v542
        %v1284 = vunpack.c.l.b16 %v543
        %v1285 = vunpack.c.h.b16 %v543
        %v1286 = vunpack.c.l.b16 %v544
        %v1287 = vunpack.c.h.b16 %v544
        %v1288 = vunpack.c.l.b16 %v545
        %v1289 = vunpack.c.h.b16 %v545
        %v1290 = vunpack.c.l.b16 %v546
        %v1291 = vunpack.c.h.b16 %v546
        %v1292 = vunpack.c.l.b16 %v547
        %v1293 = vunpack.c.h.b16 %v547
        %v1294 = vunpack.c.l.b16 %v548
        %v1295 = vunpack.c.h.b16 %v548
        %v1296 = vunpack.c.l.b16 %v549
        %v1297 = vunpack.c.h.b16 %v549
        %v1298 = vunpack.c.l.b16 %v550
        %v1299 = vunpack.c.h.b16 %v550
        %v1300 = vunpack.c.l.b16 %v551
        %v1301 = vunpack.c.h.b16 %v551
        %v1302 = vunpack.c.l.b16 %v552
        %v1303 = vunpack.c.h.b16 %v552
        %v1304 = vunpack.c.l.b16 %v553
        %v1305 = vunpack.c.h.b16 %v553
        %v1306 = vunpack.c.l.b16 %v554
        %v1307 = vunpack.c.h.b16 %v554
        %v1308 = vunpack.c.l.b16 %v555
        %v1309 = vunpack.c.h.b16 %v555
        %v1310 = vunpack.c.l.b16 %v556
        %v1311 = vunpack.c.h.b16 %v556
        %v1312 = vunpack.c.l.b16 %v557
        %v1313 = vunpack.c.h.b16 %v557
        %v1314 = vunpack.c.l.b16 %v558
        %v1315 = vunpack.c.h.b16 %v558
        %v1316 = vunpack.c.l.b16 %v559
        %v1317 = vunpack.c.h.b16 %v559
        %v1318 = vunpack.c.l.b16 %v560
        %v1319 = vunpack.c.h.b16 %v560
        %v1320 = vunpack.c.l.b16 %v561
        %v1321 = vunpack.c.h.b16 %v561
        %v1322 = vunpack.c.l.b16 %v562
        %v1323 = vunpack.c.h.b16 %v562
        %v1324 = vunpack.c.l.b16 %v563
        %v1325 = vunpack.c.h.b16 %v563
        %v1326 = vunpack.c.l.b16 %v564
        %v1327 = vunpack.c.h.b16 %v564
        %v1328 = vunpack.c.l.b16 %v565
        %v1329 = vunpack.c.h.b16 %v565
        %v1330 = vunpack.c.l.b16 %v566
        %v1331 = vunpack.c.h.b16 %v566
        %v1332 = vunpack.c.l.b16 %v567
        %v1333 = vunpack.c.h.b16 %v567
        %v1334 = vunpack.c.l.b16 %v568
        %v1335 = vunpack.c.h.b16 %v568
        %v1336 = vunpack.c.l.b16 %v569
        %v1337 = vunpack.c.h.b16 %v569
        %v1338 = vpack.c.b16 %v834, %v826
        %v1339 = vpack.c.b16 %v835, %v827
        %v1340 = vpack.c.b16 %v836, %v828
        %v1341 = vpack.c.b16 %v837, %v829
        %v1342 = vpack.c.b16 %v838, %v830
        %v1343 = vpack.c.b16 %v839, %v831
        %v1344 = vpack.c.b16 %v840, %v832
        %v1345 = vpack.c.b16 %v841, %v833
        %v1346 = vpack.c.b16 %v850, %v842
        %v1347 = vpack.c.b16 %v851, %v843
        %v1348 = vpack.c.b16 %v852, %v844
        %v1349 = vpack.c.b16 %v853, %v845
        %v1350 = vpack.c.b16 %v854, %v846
        %v1351 = vpack.c.b16 %v855, %v847
        %v1352 = vpack.c.b16 %v856, %v848
        %v1353 = vpack.c.b16 %v857, %v849
        %v1354 = vpack.c.b16 %v866, %v858
        %v1355 = vpack.c.b16 %v867, %v859
        %v1356 = vpack.c.b16 %v868, %v860
        %v1357 = vpack.c.b16 %v869, %v861
        %v1358 = vpack.c.b16 %v870, %v862
        %v1359 = vpack.c.b16 %v871, %v863
        %v1360 = vpack.c.b16 %v872, %v864
        %v1361 = vpack.c.b16 %v873, %v865
        %v1362 = vpack.c.b16 %v882, %v874
        %v1363 = vpack.c.b16 %v883, %v875
        %v1364 = vpack.c.b16 %v884, %v876
        %v1365 = vpack.c.b16 %v885, %v877
        %v1366 = vpack.c.b16 %v886, %v878
        %v1367 = vpack.c.b16 %v887, %v879
        %v1368 = vpack.c.b16 %v888, %v880
        %v1369 = vpack.c.b16 %v889, %v881
        %v1370 = vpack.c.b16 %v898, %v890
        %v1371 = vpack.c.b16 %v899, %v891
        %v1372 = vpack.c.b16 %v900, %v892
        %v1373 = vpack.c.b16 %v901, %v893
        %v1374 = vpack.c.b16 %v902, %v894
        %v1375 = vpack.c.b16 %v903, %v895
        %v1376 = vpack.c.b16 %v904, %v896
        %v1377 = vpack.c.b16 %v905, %v897
        %v1378 = vpack.c.b16 %v914, %v906
        %v1379 = vpack.c.b16 %v915, %v907
        %v1380 = vpack.c.b16 %v916, %v908
        %v1381 = vpack.c.b16 %v917, %v909
        %v1382 = vpack.c.b16 %v918, %v910
        %v1383 = vpack.c.b16 %v919, %v911
        %v1384 = vpack.c.b16 %v920, %v912
        %v1385 = vpack.c.b16 %v921, %v913
        %v1386 = vpack.c.b16 %v930, %v922
        %v1387 = vpack.c.b16 %v931, %v923
        %v1388 = vpack.c.b16 %v932, %v924
        %v1389 = vpack.c.b16 %v933, %v925
        %v1390 = vpack.c.b16 %v934, %v926
        %v1391 = vpack.c.b16 %v935, %v927
        %v1392 = vpack.c.b16 %v936, %v928
        %v1393 = vpack.c.b16 %v937, %v929
        %v1394 = vpack.c.b16 %v946, %v938
        %v1395 = vpack.c.b16 %v947, %v939
        %v1396 = vpack.c.b16 %v948, %v940
        %v1397 = vpack.c.b16 %v949, %v941
        %v1398 = vpack.c.b16 %v950, %v942
        %v1399 = vpack.c.b16 %v951, %v943
        %v1400 = vpack.c.b16 %v952, %v944
        %v1401 = vpack.c.b16 %v953, %v945
        %v1402 = vpack.c.b16 %v962, %v954
        %v1403 = vpack.c.b16 %v963, %v955
        %v1404 = vpack.c.b16 %v964, %v956
        %v1405 = vpack.c.b16 %v965, %v957
        %v1406 = vpack.c.b16 %v966, %v958
        %v1407 = vpack.c.b16 %v967, %v959
        %v1408 = vpack.c.b16 %v968, %v960
        %v1409 = vpack.c.b16 %v969, %v961
        %v1410 = vpack.c.b16 %v978, %v970
        %v1411 = vpack.c.b16 %v979, %v971
        %v1412 = vpack.c.b16 %v980, %v972
        %v1413 = vpack.c.b16 %v981, %v973
        %v1414 = vpack.c.b16 %v982, %v974
        %v1415 = vpack.c.b16 %v983, %v975
        %v1416 = vpack.c.b16 %v984, %v976
        %v1417 = vpack.c.b16 %v985, %v977
        %v1418 = vpack.c.b16 %v994, %v986
        %v1419 = vpack.c.b16 %v995, %v987
        %v1420 = vpack.c.b16 %v996, %v988
        %v1421 = vpack.c.b16 %v997, %v989
        %v1422 = vpack.c.b16 %v998, %v990
        %v1423 = vpack.c.b16 %v999, %v991
        %v1424 = vpack.c.b16 %v1000, %v992
        %v1425 = vpack.c.b16 %v1001, %v993
        %v1426 = vpack.c.b16 %v1010, %v1002
        %v1427 = vpack.c.b16 %v1011, %v1003
        %v1428 = vpack.c.b16 %v1012, %v1004
        %v1429 = vpack.c.b16 %v1013, %v1005
        %v1430 = vpack.c.b16 %v1014, %v1006
        %v1431 = vpack.c.b16 %v1015, %v1007
        %v1432 = vpack.c.b16 %v1016, %v1008
        %v1433 = vpack.c.b16 %v1017, %v1009
        %v1434 = vpack.c.b16 %v1026, %v1018
        %v1435 = vpack.c.b16 %v1027, %v1019
        %v1436 = vpack.c.b16 %v1028, %v1020
        %v1437 = vpack.c.b16 %v1029, %v1021
        %v1438 = vpack.c.b16 %v1030, %v1022
        %v1439 = vpack.c.b16 %v1031, %v1023
        %v1440 = vpack.c.b16 %v1032, %v1024
        %v1441 = vpack.c.b16 %v1033, %v1025
        %v1442 = vpack.c.b16 %v1042, %v1034
        %v1443 = vpack.c.b16 %v1043, %v1035
        %v1444 = vpack.c.b16 %v1044, %v1036
        %v1445 = vpack.c.b16 %v1045, %v1037
        %v1446 = vpack.c.b16 %v1046, %v1038
        %v1447 = vpack.c.b16 %v1047, %v1039
        %v1448 = vpack.c.b16 %v1048, %v1040
        %v1449 = vpack.c.b16 %v1049, %v1041
        %v1450 = vpack.c.b16 %v1058, %v1050
        %v1451 = vpack.c.b16 %v1059, %v1051
        %v1452 = vpack.c.b16 %v1060, %v1052
        %v1453 = vpack.c.b16 %v1061, %v1053
        %v1454 = vpack.c.b16 %v1062, %v1054
        %v1455 = vpack.c.b16 %v1063, %v1055
        %v1456 = vpack.c.b16 %v1064, %v1056
        %v1457 = vpack.c.b16 %v1065, %v1057
        %v1458 = vpack.c.b16 %v1074, %v1066
        %v1459 = vpack.c.b16 %v1075, %v1067
        %v1460 = vpack.c.b16 %v1076, %v1068
        %v1461 = vpack.c.b16 %v1077, %v1069
        %v1462 = vpack.c.b16 %v1078, %v1070
        %v1463 = vpack.c.b16 %v1079, %v1071
        %v1464 = vpack.c.b16 %v1080, %v1072
        %v1465 = vpack.c.b16 %v1081, %v1073
        %v1466 = vpack.c.b16 %v1090, %v1082
        %v1467 = vpack.c.b16 %v1091, %v1083
        %v1468 = vpack.c.b16 %v1092, %v1084
        %v1469 = vpack.c.b16 %v1093, %v1085
        %v1470 = vpack.c.b16 %v1094, %v1086
        %v1471 = vpack.c.b16 %v1095, %v1087
        %v1472 = vpack.c.b16 %v1096, %v1088
        %v1473 = vpack.c.b16 %v1097, %v1089
        %v1474 = vpack.c.b16 %v1106, %v1098
        %v1475 = vpack.c.b16 %v1107, %v1099
        %v1476 = vpack.c.b16 %v1108, %v1100
        %v1477 = vpack.c.b16 %v1109, %v1101
        %v1478 = vpack.c.b16 %v1110, %v1102
        %v1479 = vpack.c.b16 %v1111, %v1103
        %v1480 = vpack.c.b16 %v1112, %v1104
        %v1481 = vpack.c.b16 %v1113, %v1105
        %v1482 = vpack.c.b16 %v1122, %v1114
        %v1483 = vpack.c.b16 %v1123, %v1115
        %v1484 = vpack.c.b16 %v1124, %v1116
        %v1485 = vpack.c.b16 %v1125, %v1117
        %v1486 = vpack.c.b16 %v1126, %v1118
        %v1487 = vpack.c.b16 %v1127, %v1119
        %v1488 = vpack.c.b16 %v1128, %v1120
        %v1489 = vpack.c.b16 %v1129, %v1121
        %v1490 = vpack.c.b16 %v1138, %v1130
        %v1491 = vpack.c.b16 %v1139, %v1131
        %v1492 = vpack.c.b16 %v1140, %v1132
        %v1493 = vpack.c.b16 %v1141, %v1133
        %v1494 = vpack.c.b16 %v1142, %v1134
        %v1495 = vpack.c.b16 %v1143, %v1135
        %v1496 = vpack.c.b16 %v1144, %v1136
        %v1497 = vpack.c.b16 %v1145, %v1137
        %v1498 = vpack.c.b16 %v1154, %v1146
        %v1499 = vpack.c.b16 %v1155, %v1147
        %v1500 = vpack.c.b16 %v1156, %v1148
        %v1501 = vpack.c.b16 %v1157, %v1149
        %v1502 = vpack.c.b16 %v1158, %v1150
        %v1503 = vpack.c.b16 %v1159, %v1151
        %v1504 = vpack.c.b16 %v1160, %v1152
        %v1505 = vpack.c.b16 %v1161, %v1153
        %v1506 = vpack.c.b16 %v1170, %v1162
        %v1507 = vpack.c.b16 %v1171, %v1163
        %v1508 = vpack.c.b16 %v1172, %v1164
        %v1509 = vpack.c.b16 %v1173, %v1165
        %v1510 = vpack.c.b16 %v1174, %v1166
        %v1511 = vpack.c.b16 %v1175, %v1167
        %v1512 = vpack.c.b16 %v1176, %v1168
        %v1513 = vpack.c.b16 %v1177, %v1169
        %v1514 = vpack.c.b16 %v1186, %v1178
        %v1515 = vpack.c.b16 %v1187, %v1179
        %v1516 = vpack.c.b16 %v1188, %v1180
        %v1517 = vpack.c.b16 %v1189, %v1181
        %v1518 = vpack.c.b16 %v1190, %v1182
        %v1519 = vpack.c.b16 %v1191, %v1183
        %v1520 = vpack.c.b16 %v1192, %v1184
        %v1521 = vpack.c.b16 %v1193, %v1185
        %v1522 = vpack.c.b16 %v1202, %v1194
        %v1523 = vpack.c.b16 %v1203, %v1195
        %v1524 = vpack.c.b16 %v1204, %v1196
        %v1525 = vpack.c.b16 %v1205, %v1197
        %v1526 = vpack.c.b16 %v1206, %v1198
        %v1527 = vpack.c.b16 %v1207, %v1199
        %v1528 = vpack.c.b16 %v1208, %v1200
        %v1529 = vpack.c.b16 %v1209, %v1201
        %v1530 = vpack.c.b16 %v1218, %v1210
        %v1531 = vpack.c.b16 %v1219, %v1211
        %v1532 = vpack.c.b16 %v1220, %v1212
        %v1533 = vpack.c.b16 %v1221, %v1213
        %v1534 = vpack.c.b16 %v1222, %v1214
        %v1535 = vpack.c.b16 %v1223, %v1215
        %v1536 = vpack.c.b16 %v1224, %v1216
        %v1537 = vpack.c.b16 %v1225, %v1217
        %v1538 = vpack.c.b16 %v1234, %v1226
        %v1539 = vpack.c.b16 %v1235, %v1227
        %v1540 = vpack.c.b16 %v1236, %v1228
        %v1541 = vpack.c.b16 %v1237, %v1229
        %v1542 = vpack.c.b16 %v1238, %v1230
        %v1543 = vpack.c.b16 %v1239, %v1231
        %v1544 = vpack.c.b16 %v1240, %v1232
        %v1545 = vpack.c.b16 %v1241, %v1233
        %v1546 = vpack.c.b16 %v1250, %v1242
        %v1547 = vpack.c.b16 %v1251, %v1243
        %v1548 = vpack.c.b16 %v1252, %v1244
        %v1549 = vpack.c.b16 %v1253, %v1245
        %v1550 = vpack.c.b16 %v1254, %v1246
        %v1551 = vpack.c.b16 %v1255, %v1247
        %v1552 = vpack.c.b16 %v1256, %v1248
        %v1553 = vpack.c.b16 %v1257, %v1249
        %v1554 = vpack.c.b16 %v1266, %v1258
        %v1555 = vpack.c.b16 %v1267, %v1259
        %v1556 = vpack.c.b16 %v1268, %v1260
        %v1557 = vpack.c.b16 %v1269, %v1261
        %v1558 = vpack.c.b16 %v1270, %v1262
        %v1559 = vpack.c.b16 %v1271, %v1263
        %v1560 = vpack.c.b16 %v1272, %v1264
        %v1561 = vpack.c.b16 %v1273, %v1265
        %v1562 = vpack.c.b16 %v1282, %v1274
        %v1563 = vpack.c.b16 %v1283, %v1275
        %v1564 = vpack.c.b16 %v1284, %v1276
        %v1565 = vpack.c.b16 %v1285, %v1277
        %v1566 = vpack.c.b16 %v1286, %v1278
        %v1567 = vpack.c.b16 %v1287, %v1279
        %v1568 = vpack.c.b16 %v1288, %v1280
        %v1569 = vpack.c.b16 %v1289, %v1281
        %v1570 = vpack.c.b16 %v1298, %v1290
        %v1571 = vpack.c.b16 %v1299, %v1291
        %v1572 = vpack.c.b16 %v1300, %v1292
        %v1573 = vpack.c.b16 %v1301, %v1293
        %v1574 = vpack.c.b16 %v1302, %v1294
        %v1575 = vpack.c.b16 %v1303, %v1295
        %v1576 = vpack.c.b16 %v1304, %v1296
        %v1577 = vpack.c.b16 %v1305, %v1297
        %v1578 = vpack.c.b16 %v1314, %v1306
        %v1579 = vpack.c.b16 %v1315, %v1307
        %v1580 = vpack.c.b16 %v1316, %v1308
        %v1581 = vpack.c.b16 %v1317, %v1309
        %v1582 = vpack.c.b16 %v1318, %v1310
        %v1583 = vpack.c.b16 %v1319, %v1311
        %v1584 = vpack.c.b16 %v1320, %v1312
        %v1585 = vpack.c.b16 %v1321, %v1313
        %v1586 = vpack.c.b16 %v1330, %v1322
        %v1587 = vpack.c.b16 %v1331, %v1323
        %v1588 = vpack.c.b16 %v1332, %v1324
        %v1589 = vpack.c.b16 %v1333, %v1325
        %v1590 = vpack.c.b16 %v1334, %v1326
        %v1591 = vpack.c.b16 %v1335, %v1327
        %v1592 = vpack.c.b16 %v1336, %v1328
        %v1593 = vpack.c.b16 %v1337, %v1329
        %1850 = vmatprep.subr.bf16.mxu0 %v1339
        %1851 = vmatpush1.bf16.msra.mxu0 %v1338
        %1852 = vmatprep.subr.bf16.mxu0 %v1347
        %1853 = vmatpush1.bf16.msra.mxu0 %v1346
        %1854 = vmatprep.subr.bf16.mxu0 %v1355
        %1855 = vmatpush1.bf16.msra.mxu0 %v1354
        %1856 = vmatprep.subr.bf16.mxu0 %v1363
        %1857 = vmatpush1.bf16.msra.mxu0 %v1362
        %1858 = vmatprep.subr.bf16.mxu0 %v1371
        %1859 = vmatpush1.bf16.msra.mxu0 %v1370
        %1860 = vmatprep.subr.bf16.mxu0 %v1379
        %1861 = vmatpush1.bf16.msra.mxu0 %v1378
        %1862 = vmatprep.subr.bf16.mxu0 %v1387
        %1863 = vmatpush1.bf16.msra.mxu0 %v1386
        %1864 = vmatprep.subr.bf16.mxu0 %v1395
        %1865 = vmatpush1.bf16.msra.mxu0 %v1394
        %1866 = vmatprep.subr.bf16.mxu0 %v1403
        %1867 = vmatpush1.bf16.msra.mxu0 %v1402
        %1868 = vmatprep.subr.bf16.mxu0 %v1411
        %1869 = vmatpush1.bf16.msra.mxu0 %v1410
        %1870 = vmatprep.subr.bf16.mxu0 %v1419
        %1871 = vmatpush1.bf16.msra.mxu0 %v1418
        %1872 = vmatprep.subr.bf16.mxu0 %v1427
        %1873 = vmatpush1.bf16.msra.mxu0 %v1426
        %1874 = vmatprep.subr.bf16.mxu0 %v1435
        %1875 = vmatpush1.bf16.msra.mxu0 %v1434
        %1876 = vmatprep.subr.bf16.mxu0 %v1443
        %1877 = vmatpush1.bf16.msra.mxu0 %v1442
        %1878 = vmatprep.subr.bf16.mxu0 %v1451
        %1879 = vmatpush1.bf16.msra.mxu0 %v1450
        %1880 = vmatprep.subr.bf16.mxu0 %v1459
        %1881 = vmatpush1.bf16.msra.mxu0 %v1458
        %1882 = vmatprep.mubr.bf16.mxu0 %v311
        %1883 = vmatmul.mubr.bf16.gmra.mrb[0].mxu0 %v310
        %v1884 = vpop.f32.mrb[0].mxu0
        %v1885 = vadd.f32 0.0, %v1884
        %v1886 = vpop.f32.mrb[0].mxu0
        %v1887 = vadd.f32 0.0, %v1886
        %v1888 = vpop.f32.mrb[0].mxu0
        %v1889 = vpop.f32.mrb[0].mxu0
        %1890 = vdwg.mxu0
        %1891 = vmatprep.subr.bf16.mxu0 %v1467
        %1892 = vmatpush1.bf16.msra.mxu0 %v1466
        %1893 = vmatprep.subr.bf16.mxu0 %v1475
        %1894 = vmatpush1.bf16.msra.mxu0 %v1474
        %1895 = vmatprep.subr.bf16.mxu0 %v1483
        %1896 = vmatpush1.bf16.msra.mxu0 %v1482
        %1897 = vmatprep.subr.bf16.mxu0 %v1491
        %1898 = vmatpush1.bf16.msra.mxu0 %v1490
        %1899 = vmatprep.subr.bf16.mxu0 %v1499
        %1900 = vmatpush1.bf16.msra.mxu0 %v1498
        %1901 = vmatprep.subr.bf16.mxu0 %v1507
        %1902 = vmatpush1.bf16.msra.mxu0 %v1506
        %1903 = vmatprep.subr.bf16.mxu0 %v1515
        %1904 = vmatpush1.bf16.msra.mxu0 %v1514
        %1905 = vmatprep.subr.bf16.mxu0 %v1523
        %1906 = vmatpush1.bf16.msra.mxu0 %v1522
        %1907 = vmatprep.subr.bf16.mxu0 %v1531
        %1908 = vmatpush1.bf16.msra.mxu0 %v1530
        %1909 = vmatprep.subr.bf16.mxu0 %v1539
        %1910 = vmatpush1.bf16.msra.mxu0 %v1538
        %1911 = vmatprep.subr.bf16.mxu0 %v1547
        %1912 = vmatpush1.bf16.msra.mxu0 %v1546
        %1913 = vmatprep.subr.bf16.mxu0 %v1555
        %1914 = vmatpush1.bf16.msra.mxu0 %v1554
        %1915 = vmatprep.subr.bf16.mxu0 %v1563
        %1916 = vmatpush1.bf16.msra.mxu0 %v1562
        %1917 = vmatprep.subr.bf16.mxu0 %v1571
        %1918 = vmatpush1.bf16.msra.mxu0 %v1570
        %1919 = vmatprep.subr.bf16.mxu0 %v1579
        %1920 = vmatpush1.bf16.msra.mxu0 %v1578
        %1921 = vmatprep.subr.bf16.mxu0 %v1587
        %1922 = vmatpush1.bf16.msra.mxu0 %v1586
        %1923 = vmatprep.mubr.bf16.mxu0 %v313
        %1924 = vmatmul.mubr.bf16.gmra.mrb[0].mxu0 %v312
        %v1925 = vpop.f32.mrb[0].mxu0
        %v1926 = vadd.f32 %v1885, %v1925
        %v1927 = vpop.f32.mrb[0].mxu0
        %v1928 = vadd.f32 %v1887, %v1927
        %v1929 = vpop.f32.mrb[0].mxu0
        %v1930 = vpop.f32.mrb[0].mxu0
        %1931 = vdwg.mxu0
        %1932 = vmatprep.subr.bf16.mxu0 %v1341
        %1933 = vmatpush1.bf16.msra.mxu0 %v1340
        %1934 = vmatprep.subr.bf16.mxu0 %v1349
        %1935 = vmatpush1.bf16.msra.mxu0 %v1348
        %1936 = vmatprep.subr.bf16.mxu0 %v1357
        %1937 = vmatpush1.bf16.msra.mxu0 %v1356
        %1938 = vmatprep.subr.bf16.mxu0 %v1365
        %1939 = vmatpush1.bf16.msra.mxu0 %v1364
        %1940 = vmatprep.subr.bf16.mxu0 %v1373
        %1941 = vmatpush1.bf16.msra.mxu0 %v1372
        %1942 = vmatprep.subr.bf16.mxu0 %v1381
        %1943 = vmatpush1.bf16.msra.mxu0 %v1380
        %1944 = vmatprep.subr.bf16.mxu0 %v1389
        %1945 = vmatpush1.bf16.msra.mxu0 %v1388
        %1946 = vmatprep.subr.bf16.mxu0 %v1397
        %1947 = vmatpush1.bf16.msra.mxu0 %v1396
        %1948 = vmatprep.subr.bf16.mxu0 %v1405
        %1949 = vmatpush1.bf16.msra.mxu0 %v1404
        %1950 = vmatprep.subr.bf16.mxu0 %v1413
        %1951 = vmatpush1.bf16.msra.mxu0 %v1412
        %1952 = vmatprep.subr.bf16.mxu0 %v1421
        %1953 = vmatpush1.bf16.msra.mxu0 %v1420
        %1954 = vmatprep.subr.bf16.mxu0 %v1429
        %1955 = vmatpush1.bf16.msra.mxu0 %v1428
        %1956 = vmatprep.subr.bf16.mxu0 %v1437
        %1957 = vmatpush1.bf16.msra.mxu0 %v1436
        %1958 = vmatprep.subr.bf16.mxu0 %v1445
        %1959 = vmatpush1.bf16.msra.mxu0 %v1444
        %1960 = vmatprep.subr.bf16.mxu0 %v1453
        %1961 = vmatpush1.bf16.msra.mxu0 %v1452
        %1962 = vmatprep.subr.bf16.mxu0 %v1461
        %1963 = vmatpush1.bf16.msra.mxu0 %v1460
        %1964 = vmatprep.mubr.bf16.mxu0 %v311
        %1965 = vmatmul.mubr.bf16.gmra.mrb[0].mxu0 %v310
        %v1966 = vpop.f32.mrb[0].mxu0
        %v1967 = vadd.f32 0.0, %v1966
        %v1968 = vpop.f32.mrb[0].mxu0
        %v1969 = vadd.f32 0.0, %v1968
        %v1970 = vpop.f32.mrb[0].mxu0
        %v1971 = vpop.f32.mrb[0].mxu0
        %1972 = vdwg.mxu0
        %1973 = vmatprep.subr.bf16.mxu0 %v1469
        %1974 = vmatpush1.bf16.msra.mxu0 %v1468
        %1975 = vmatprep.subr.bf16.mxu0 %v1477
        %1976 = vmatpush1.bf16.msra.mxu0 %v1476
        %1977 = vmatprep.subr.bf16.mxu0 %v1485
        %1978 = vmatpush1.bf16.msra.mxu0 %v1484
        %1979 = vmatprep.subr.bf16.mxu0 %v1493
        %1980 = vmatpush1.bf16.msra.mxu0 %v1492
        %1981 = vmatprep.subr.bf16.mxu0 %v1501
        %1982 = vmatpush1.bf16.msra.mxu0 %v1500
        %1983 = vmatprep.subr.bf16.mxu0 %v1509
        %1984 = vmatpush1.bf16.msra.mxu0 %v1508
        %1985 = vmatprep.subr.bf16.mxu0 %v1517
        %1986 = vmatpush1.bf16.msra.mxu0 %v1516
        %1987 = vmatprep.subr.bf16.mxu0 %v1525
        %1988 = vmatpush1.bf16.msra.mxu0 %v1524
        %1989 = vmatprep.subr.bf16.mxu0 %v1533
        %1990 = vmatpush1.bf16.msra.mxu0 %v1532
        %1991 = vmatprep.subr.bf16.mxu0 %v1541
        %1992 = vmatpush1.bf16.msra.mxu0 %v1540
        %1993 = vmatprep.subr.bf16.mxu0 %v1549
        %1994 = vmatpush1.bf16.msra.mxu0 %v1548
        %1995 = vmatprep.subr.bf16.mxu0 %v1557
        %1996 = vmatpush1.bf16.msra.mxu0 %v1556
        %1997 = vmatprep.subr.bf16.mxu0 %v1565
        %1998 = vmatpush1.bf16.msra.mxu0 %v1564
        %1999 = vmatprep.subr.bf16.mxu0 %v1573
        %2000 = vmatpush1.bf16.msra.mxu0 %v1572
        %2001 = vmatprep.subr.bf16.mxu0 %v1581
        %2002 = vmatpush1.bf16.msra.mxu0 %v1580
        %2003 = vmatprep.subr.bf16.mxu0 %v1589
        %2004 = vmatpush1.bf16.msra.mxu0 %v1588
        %2005 = vmatprep.mubr.bf16.mxu0 %v313
        %2006 = vmatmul.mubr.bf16.gmra.mrb[0].mxu0 %v312
        %v2007 = vpop.f32.mrb[0].mxu0
        %v2008 = vadd.f32 %v1967, %v2007
        %v2009 = vpop.f32.mrb[0].mxu0
        %v2010 = vadd.f32 %v1969, %v2009
        %v2011 = vpop.f32.mrb[0].mxu0
        %v2012 = vpop.f32.mrb[0].mxu0
        %2013 = vdwg.mxu0
        %2014 = vmatprep.subr.bf16.mxu0 %v1343
        %2015 = vmatpush1.bf16.msra.mxu0 %v1342
        %2016 = vmatprep.subr.bf16.mxu0 %v1351
        %2017 = vmatpush1.bf16.msra.mxu0 %v1350
        %2018 = vmatprep.subr.bf16.mxu0 %v1359
        %2019 = vmatpush1.bf16.msra.mxu0 %v1358
        %2020 = vmatprep.subr.bf16.mxu0 %v1367
        %2021 = vmatpush1.bf16.msra.mxu0 %v1366
        %2022 = vmatprep.subr.bf16.mxu0 %v1375
        %2023 = vmatpush1.bf16.msra.mxu0 %v1374
        %2024 = vmatprep.subr.bf16.mxu0 %v1383
        %2025 = vmatpush1.bf16.msra.mxu0 %v1382
        %2026 = vmatprep.subr.bf16.mxu0 %v1391
        %2027 = vmatpush1.bf16.msra.mxu0 %v1390
        %2028 = vmatprep.subr.bf16.mxu0 %v1399
        %2029 = vmatpush1.bf16.msra.mxu0 %v1398
        %2030 = vmatprep.subr.bf16.mxu0 %v1407
        %2031 = vmatpush1.bf16.msra.mxu0 %v1406
        %2032 = vmatprep.subr.bf16.mxu0 %v1415
        %2033 = vmatpush1.bf16.msra.mxu0 %v1414
        %2034 = vmatprep.subr.bf16.mxu0 %v1423
        %2035 = vmatpush1.bf16.msra.mxu0 %v1422
        %2036 = vmatprep.subr.bf16.mxu0 %v1431
        %2037 = vmatpush1.bf16.msra.mxu0 %v1430
        %2038 = vmatprep.subr.bf16.mxu0 %v1439
        %2039 = vmatpush1.bf16.msra.mxu0 %v1438
        %2040 = vmatprep.subr.bf16.mxu0 %v1447
        %2041 = vmatpush1.bf16.msra.mxu0 %v1446
        %2042 = vmatprep.subr.bf16.mxu0 %v1455
        %2043 = vmatpush1.bf16.msra.mxu0 %v1454
        %2044 = vmatprep.subr.bf16.mxu0 %v1463
        %2045 = vmatpush1.bf16.msra.mxu0 %v1462
        %2046 = vmatprep.mubr.bf16.mxu0 %v311
        %2047 = vmatmul.mubr.bf16.gmra.mrb[0].mxu0 %v310
        %v2048 = vpop.f32.mrb[0].mxu0
        %v2049 = vadd.f32 0.0, %v2048
        %v2050 = vpop.f32.mrb[0].mxu0
        %v2051 = vadd.f32 0.0, %v2050
        %v2052 = vpop.f32.mrb[0].mxu0
        %v2053 = vpop.f32.mrb[0].mxu0
        %2054 = vdwg.mxu0
        %2055 = vmatprep.subr.bf16.mxu0 %v1471
        %2056 = vmatpush1.bf16.msra.mxu0 %v1470
        %2057 = vmatprep.subr.bf16.mxu0 %v1479
        %2058 = vmatpush1.bf16.msra.mxu0 %v1478
        %2059 = vmatprep.subr.bf16.mxu0 %v1487
        %2060 = vmatpush1.bf16.msra.mxu0 %v1486
        %2061 = vmatprep.subr.bf16.mxu0 %v1495
        %2062 = vmatpush1.bf16.msra.mxu0 %v1494
        %2063 = vmatprep.subr.bf16.mxu0 %v1503
        %2064 = vmatpush1.bf16.msra.mxu0 %v1502
        %2065 = vmatprep.subr.bf16.mxu0 %v1511
        %2066 = vmatpush1.bf16.msra.mxu0 %v1510
        %2067 = vmatprep.subr.bf16.mxu0 %v1519
        %2068 = vmatpush1.bf16.msra.mxu0 %v1518
        %2069 = vmatprep.subr.bf16.mxu0 %v1527
        %2070 = vmatpush1.bf16.msra.mxu0 %v1526
        %2071 = vmatprep.subr.bf16.mxu0 %v1535
        %2072 = vmatpush1.bf16.msra.mxu0 %v1534
        %2073 = vmatprep.subr.bf16.mxu0 %v1543
        %2074 = vmatpush1.bf16.msra.mxu0 %v1542
        %2075 = vmatprep.subr.bf16.mxu0 %v1551
        %2076 = vmatpush1.bf16.msra.mxu0 %v1550
        %2077 = vmatprep.subr.bf16.mxu0 %v1559
        %2078 = vmatpush1.bf16.msra.mxu0 %v1558
        %2079 = vmatprep.subr.bf16.mxu0 %v1567
        %2080 = vmatpush1.bf16.msra.mxu0 %v1566
        %2081 = vmatprep.subr.bf16.mxu0 %v1575
        %2082 = vmatpush1.bf16.msra.mxu0 %v1574
        %2083 = vmatprep.subr.bf16.mxu0 %v1583
        %2084 = vmatpush1.bf16.msra.mxu0 %v1582
        %2085 = vmatprep.subr.bf16.mxu0 %v1591
        %2086 = vmatpush1.bf16.msra.mxu0 %v1590
        %2087 = vmatprep.mubr.bf16.mxu0 %v313
        %2088 = vmatmul.mubr.bf16.gmra.mrb[0].mxu0 %v312
        %v2089 = vpop.f32.mrb[0].mxu0
        %v2090 = vadd.f32 %v2049, %v2089
        %v2091 = vpop.f32.mrb[0].mxu0
        %v2092 = vadd.f32 %v2051, %v2091
        %v2093 = vpop.f32.mrb[0].mxu0
        %v2094 = vpop.f32.mrb[0].mxu0
        %2095 = vdwg.mxu0
        %2096 = vmatprep.subr.bf16.mxu0 %v1345
        %2097 = vmatpush1.bf16.msra.mxu0 %v1344
        %2098 = vmatprep.subr.bf16.mxu0 %v1353
        %2099 = vmatpush1.bf16.msra.mxu0 %v1352
        %2100 = vmatprep.subr.bf16.mxu0 %v1361
        %2101 = vmatpush1.bf16.msra.mxu0 %v1360
        %2102 = vmatprep.subr.bf16.mxu0 %v1369
        %2103 = vmatpush1.bf16.msra.mxu0 %v1368
        %2104 = vmatprep.subr.bf16.mxu0 %v1377
        %2105 = vmatpush1.bf16.msra.mxu0 %v1376
        %2106 = vmatprep.subr.bf16.mxu0 %v1385
        %2107 = vmatpush1.bf16.msra.mxu0 %v1384
        %2108 = vmatprep.subr.bf16.mxu0 %v1393
        %2109 = vmatpush1.bf16.msra.mxu0 %v1392
        %2110 = vmatprep.subr.bf16.mxu0 %v1401
        %2111 = vmatpush1.bf16.msra.mxu0 %v1400
        %2112 = vmatprep.subr.bf16.mxu0 %v1409
        %2113 = vmatpush1.bf16.msra.mxu0 %v1408
        %2114 = vmatprep.subr.bf16.mxu0 %v1417
        %2115 = vmatpush1.bf16.msra.mxu0 %v1416
        %2116 = vmatprep.subr.bf16.mxu0 %v1425
        %2117 = vmatpush1.bf16.msra.mxu0 %v1424
        %2118 = vmatprep.subr.bf16.mxu0 %v1433
        %2119 = vmatpush1.bf16.msra.mxu0 %v1432
        %2120 = vmatprep.subr.bf16.mxu0 %v1441
        %2121 = vmatpush1.bf16.msra.mxu0 %v1440
        %2122 = vmatprep.subr.bf16.mxu0 %v1449
        %2123 = vmatpush1.bf16.msra.mxu0 %v1448
        %2124 = vmatprep.subr.bf16.mxu0 %v1457
        %2125 = vmatpush1.bf16.msra.mxu0 %v1456
        %2126 = vmatprep.subr.bf16.mxu0 %v1465
        %2127 = vmatpush1.bf16.msra.mxu0 %v1464
        %2128 = vmatprep.mubr.bf16.mxu0 %v311
        %2129 = vmatmul.mubr.bf16.gmra.mrb[0].mxu0 %v310
        %v2130 = vpop.f32.mrb[0].mxu0
        %v2131 = vadd.f32 0.0, %v2130
        %v2132 = vpop.f32.mrb[0].mxu0
        %v2133 = vadd.f32 0.0, %v2132
        %v2134 = vpop.f32.mrb[0].mxu0
        %v2135 = vpop.f32.mrb[0].mxu0
        %2136 = vdwg.mxu0
        %2137 = vmatprep.subr.bf16.mxu0 %v1473
        %2138 = vmatpush1.bf16.msra.mxu0 %v1472
        %2139 = vmatprep.subr.bf16.mxu0 %v1481
        %2140 = vmatpush1.bf16.msra.mxu0 %v1480
        %2141 = vmatprep.subr.bf16.mxu0 %v1489
        %2142 = vmatpush1.bf16.msra.mxu0 %v1488
        %2143 = vmatprep.subr.bf16.mxu0 %v1497
        %2144 = vmatpush1.bf16.msra.mxu0 %v1496
        %2145 = vmatprep.subr.bf16.mxu0 %v1505
        %2146 = vmatpush1.bf16.msra.mxu0 %v1504
        %2147 = vmatprep.subr.bf16.mxu0 %v1513
        %2148 = vmatpush1.bf16.msra.mxu0 %v1512
        %2149 = vmatprep.subr.bf16.mxu0 %v1521
        %2150 = vmatpush1.bf16.msra.mxu0 %v1520
        %2151 = vmatprep.subr.bf16.mxu0 %v1529
        %2152 = vmatpush1.bf16.msra.mxu0 %v1528
        %2153 = vmatprep.subr.bf16.mxu0 %v1537
        %2154 = vmatpush1.bf16.msra.mxu0 %v1536
        %2155 = vmatprep.subr.bf16.mxu0 %v1545
        %2156 = vmatpush1.bf16.msra.mxu0 %v1544
        %2157 = vmatprep.subr.bf16.mxu0 %v1553
        %2158 = vmatpush1.bf16.msra.mxu0 %v1552
        %2159 = vmatprep.subr.bf16.mxu0 %v1561
        %2160 = vmatpush1.bf16.msra.mxu0 %v1560
        %2161 = vmatprep.subr.bf16.mxu0 %v1569
        %2162 = vmatpush1.bf16.msra.mxu0 %v1568
        %2163 = vmatprep.subr.bf16.mxu0 %v1577
        %2164 = vmatpush1.bf16.msra.mxu0 %v1576
        %2165 = vmatprep.subr.bf16.mxu0 %v1585
        %2166 = vmatpush1.bf16.msra.mxu0 %v1584
        %2167 = vmatprep.subr.bf16.mxu0 %v1593
        %2168 = vmatpush1.bf16.msra.mxu0 %v1592
        %2169 = vmatprep.mubr.bf16.mxu0 %v313
        %2170 = vmatmul.mubr.bf16.gmra.mrb[0].mxu0 %v312
        %v2171 = vpop.f32.mrb[0].mxu0
        %v2172 = vadd.f32 %v2131, %v2171
        %v2173 = vpop.f32.mrb[0].mxu0
        %v2174 = vadd.f32 %v2133, %v2173
        %v2175 = vpop.f32.mrb[0].mxu0
        %v2176 = vpop.f32.mrb[0].mxu0
        %2177 = vdwg.mxu0
        %v2178 = vadd.f32 %v298, %v1926
        %v2179 = vadd.f32 %v299, %v1928
        %v2180 = vadd.f32 %v300, %v2008
        %v2181 = vadd.f32 %v301, %v2010
        %v2182 = vadd.f32 %v302, %v2090
        %v2183 = vadd.f32 %v303, %v2092
        %v2184 = vadd.f32 %v304, %v2172
        %v2185 = vadd.f32 %v305, %v2174
        %v2186 = vxor.u32 %v2178, 2147483648
        %v2187 = vxor.u32 %v2179, 2147483648
        %v2188 = vxor.u32 %v2180, 2147483648
        %v2189 = vxor.u32 %v2181, 2147483648
        %v2190 = vxor.u32 %v2182, 2147483648
        %v2191 = vxor.u32 %v2183, 2147483648
        %v2192 = vxor.u32 %v2184, 2147483648
        %v2193 = vxor.u32 %v2185, 2147483648
        %v2194 = vmul.f32 %v2186, 1.442695
        %v2195 = vpow.pop %v2194
        %v2196 = vmul.f32 %v2187, 1.442695
        %v2197 = vpow.pop %v2196
        %v2198 = vmul.f32 %v2188, 1.442695
        %v2199 = vpow.pop %v2198
        %v2200 = vmul.f32 %v2189, 1.442695
        %v2201 = vpow.pop %v2200
        %v2202 = vmul.f32 %v2190, 1.442695
        %v2203 = vpow.pop %v2202
        %v2204 = vmul.f32 %v2191, 1.442695
        %v2205 = vpow.pop %v2204
        %v2206 = vmul.f32 %v2192, 1.442695
        %v2207 = vpow.pop %v2206
        %v2208 = vmul.f32 %v2193, 1.442695
        %v2209 = vpow.pop %v2208
        %v2210 = vadd.f32 %v2195, 1.0
        %v2211 = vadd.f32 %v2197, 1.0
        %v2212 = vadd.f32 %v2199, 1.0
        %v2213 = vadd.f32 %v2201, 1.0
        %v2214 = vadd.f32 %v2203, 1.0
        %v2215 = vadd.f32 %v2205, 1.0
        %v2216 = vadd.f32 %v2207, 1.0
        %v2217 = vadd.f32 %v2209, 1.0
        %v2218 = vrcp.pop %v2210
        %v2219 = vmul.f32 1.0, %v2218
        %v2220 = vrcp.pop %v2211
        %v2221 = vmul.f32 1.0, %v2220
        %v2222 = vrcp.pop %v2212
        %v2223 = vmul.f32 1.0, %v2222
        %v2224 = vrcp.pop %v2213
        %v2225 = vmul.f32 1.0, %v2224
        %v2226 = vrcp.pop %v2214
        %v2227 = vmul.f32 1.0, %v2226
        %v2228 = vrcp.pop %v2215
        %v2229 = vmul.f32 1.0, %v2228
        %v2230 = vrcp.pop %v2216
        %v2231 = vmul.f32 1.0, %v2230
        %v2232 = vrcp.pop %v2217
        %v2233 = vmul.f32 1.0, %v2232
        %v2234 = vmul.f32 %v2219, %v294
        %v2235 = vmul.f32 %v2221, %v295
        %v2236 = vmul.f32 %v2223, %v296
        %v2237 = vmul.f32 %v2225, %v297
        %v2238 = vpack.c.bf16 %v2234, %v2234
        %v2239 = vpack.c.bf16 %v2235, %v2235
        %v2240 = vpack.c.bf16 %v2236, %v2236
        %v2241 = vpack.c.bf16 %v2237, %v2237
        %v2242 = vld [vmem:[#allocation9] sm:$0xff]
        %v2243 = vld [vmem:[#allocation9 + $0x8] sm:$0xff]
        %v2244 = vld [vmem:[#allocation9 + $0x10] sm:$0xff]
        %v2245 = vld [vmem:[#allocation9 + $0x18] sm:$0xff]
        %v2246 = vld [vmem:[#allocation9 + $0x20] sm:$0xff]
        %v2247 = vld [vmem:[#allocation9 + $0x28] sm:$0xff]
        %v2248 = vld [vmem:[#allocation9 + $0x30] sm:$0xff]
        %v2249 = vld [vmem:[#allocation9 + $0x38] sm:$0xff]
        %v2250 = vld [vmem:[#allocation9 + $0x40] sm:$0xff]
        %v2251 = vld [vmem:[#allocation9 + $0x48] sm:$0xff]
        %v2252 = vld [vmem:[#allocation9 + $0x50] sm:$0xff]
        %v2253 = vld [vmem:[#allocation9 + $0x58] sm:$0xff]
        %v2254 = vld [vmem:[#allocation9 + $0x60] sm:$0xff]
        %v2255 = vld [vmem:[#allocation9 + $0x68] sm:$0xff]
        %v2256 = vld [vmem:[#allocation9 + $0x70] sm:$0xff]
        %v2257 = vld [vmem:[#allocation9 + $0x78] sm:$0xff]
        %v2258 = vld [vmem:[#allocation9 + $0x80] sm:$0xff]
        %v2259 = vld [vmem:[#allocation9 + $0x88] sm:$0xff]
        %v2260 = vld [vmem:[#allocation9 + $0x90] sm:$0xff]
        %v2261 = vld [vmem:[#allocation9 + $0x98] sm:$0xff]
        %v2262 = vld [vmem:[#allocation9 + $0xa0] sm:$0xff]
        %v2263 = vld [vmem:[#allocation9 + $0xa8] sm:$0xff]
        %v2264 = vld [vmem:[#allocation9 + $0xb0] sm:$0xff]
        %v2265 = vld [vmem:[#allocation9 + $0xb8] sm:$0xff]
        %v2266 = vld [vmem:[#allocation9 + $0xc0] sm:$0xff]
        %v2267 = vld [vmem:[#allocation9 + $0xc8] sm:$0xff]
        %v2268 = vld [vmem:[#allocation9 + $0xd0] sm:$0xff]
        %v2269 = vld [vmem:[#allocation9 + $0xd8] sm:$0xff]
        %v2270 = vld [vmem:[#allocation9 + $0xe0] sm:$0xff]
        %v2271 = vld [vmem:[#allocation9 + $0xe8] sm:$0xff]
        %v2272 = vld [vmem:[#allocation9 + $0xf0] sm:$0xff]
        %v2273 = vld [vmem:[#allocation9 + $0xf8] sm:$0xff]
        %v2274 = vld [vmem:[#allocation9 + $0x100] sm:$0xff]
        %v2275 = vld [vmem:[#allocation9 + $0x108] sm:$0xff]
        %v2276 = vld [vmem:[#allocation9 + $0x110] sm:$0xff]
        %v2277 = vld [vmem:[#allocation9 + $0x118] sm:$0xff]
        %v2278 = vld [vmem:[#allocation9 + $0x120] sm:$0xff]
        %v2279 = vld [vmem:[#allocation9 + $0x128] sm:$0xff]
        %v2280 = vld [vmem:[#allocation9 + $0x130] sm:$0xff]
        %v2281 = vld [vmem:[#allocation9 + $0x138] sm:$0xff]
        %v2282 = vld [vmem:[#allocation9 + $0x140] sm:$0xff]
        %v2283 = vld [vmem:[#allocation9 + $0x148] sm:$0xff]
        %v2284 = vld [vmem:[#allocation9 + $0x150] sm:$0xff]
        %v2285 = vld [vmem:[#allocation9 + $0x158] sm:$0xff]
        %v2286 = vld [vmem:[#allocation9 + $0x160] sm:$0xff]
        %v2287 = vld [vmem:[#allocation9 + $0x168] sm:$0xff]
        %v2288 = vld [vmem:[#allocation9 + $0x170] sm:$0xff]
        %v2289 = vld [vmem:[#allocation9 + $0x178] sm:$0xff]
        %v2290 = vld [vmem:[#allocation9 + $0x180] sm:$0xff]
        %v2291 = vld [vmem:[#allocation9 + $0x188] sm:$0xff]
        %v2292 = vld [vmem:[#allocation9 + $0x190] sm:$0xff]
        %v2293 = vld [vmem:[#allocation9 + $0x198] sm:$0xff]
        %v2294 = vld [vmem:[#allocation9 + $0x1a0] sm:$0xff]
        %v2295 = vld [vmem:[#allocation9 + $0x1a8] sm:$0xff]
        %v2296 = vld [vmem:[#allocation9 + $0x1b0] sm:$0xff]
        %v2297 = vld [vmem:[#allocation9 + $0x1b8] sm:$0xff]
        %v2298 = vld [vmem:[#allocation9 + $0x1c0] sm:$0xff]
        %v2299 = vld [vmem:[#allocation9 + $0x1c8] sm:$0xff]
        %v2300 = vld [vmem:[#allocation9 + $0x1d0] sm:$0xff]
        %v2301 = vld [vmem:[#allocation9 + $0x1d8] sm:$0xff]
        %v2302 = vld [vmem:[#allocation9 + $0x1e0] sm:$0xff]
        %v2303 = vld [vmem:[#allocation9 + $0x1e8] sm:$0xff]
        %v2304 = vld [vmem:[#allocation9 + $0x1f0] sm:$0xff]
        %v2305 = vld [vmem:[#allocation9 + $0x1f8] sm:$0xff]
        %v2306 = vld [vmem:[#allocation9 + $0x200] sm:$0xff]
        %v2307 = vld [vmem:[#allocation9 + $0x208] sm:$0xff]
        %v2308 = vld [vmem:[#allocation9 + $0x210] sm:$0xff]
        %v2309 = vld [vmem:[#allocation9 + $0x218] sm:$0xff]
        %v2310 = vld [vmem:[#allocation9 + $0x220] sm:$0xff]
        %v2311 = vld [vmem:[#allocation9 + $0x228] sm:$0xff]
        %v2312 = vld [vmem:[#allocation9 + $0x230] sm:$0xff]
        %v2313 = vld [vmem:[#allocation9 + $0x238] sm:$0xff]
        %v2314 = vld [vmem:[#allocation9 + $0x240] sm:$0xff]
        %v2315 = vld [vmem:[#allocation9 + $0x248] sm:$0xff]
        %v2316 = vld [vmem:[#allocation9 + $0x250] sm:$0xff]
        %v2317 = vld [vmem:[#allocation9 + $0x258] sm:$0xff]
        %v2318 = vld [vmem:[#allocation9 + $0x260] sm:$0xff]
        %v2319 = vld [vmem:[#allocation9 + $0x268] sm:$0xff]
        %v2320 = vld [vmem:[#allocation9 + $0x270] sm:$0xff]
        %v2321 = vld [vmem:[#allocation9 + $0x278] sm:$0xff]
        %v2322 = vld [vmem:[#allocation9 + $0x280] sm:$0xff]
        %v2323 = vld [vmem:[#allocation9 + $0x288] sm:$0xff]
        %v2324 = vld [vmem:[#allocation9 + $0x290] sm:$0xff]
        %v2325 = vld [vmem:[#allocation9 + $0x298] sm:$0xff]
        %v2326 = vld [vmem:[#allocation9 + $0x2a0] sm:$0xff]
        %v2327 = vld [vmem:[#allocation9 + $0x2a8] sm:$0xff]
        %v2328 = vld [vmem:[#allocation9 + $0x2b0] sm:$0xff]
        %v2329 = vld [vmem:[#allocation9 + $0x2b8] sm:$0xff]
        %v2330 = vld [vmem:[#allocation9 + $0x2c0] sm:$0xff]
        %v2331 = vld [vmem:[#allocation9 + $0x2c8] sm:$0xff]
        %v2332 = vld [vmem:[#allocation9 + $0x2d0] sm:$0xff]
        %v2333 = vld [vmem:[#allocation9 + $0x2d8] sm:$0xff]
        %v2334 = vld [vmem:[#allocation9 + $0x2e0] sm:$0xff]
        %v2335 = vld [vmem:[#allocation9 + $0x2e8] sm:$0xff]
        %v2336 = vld [vmem:[#allocation9 + $0x2f0] sm:$0xff]
        %v2337 = vld [vmem:[#allocation9 + $0x2f8] sm:$0xff]
        %v2338 = vld [vmem:[#allocation9 + $0x300] sm:$0xff]
        %v2339 = vld [vmem:[#allocation9 + $0x308] sm:$0xff]
        %v2340 = vld [vmem:[#allocation9 + $0x310] sm:$0xff]
        %v2341 = vld [vmem:[#allocation9 + $0x318] sm:$0xff]
        %v2342 = vld [vmem:[#allocation9 + $0x320] sm:$0xff]
        %v2343 = vld [vmem:[#allocation9 + $0x328] sm:$0xff]
        %v2344 = vld [vmem:[#allocation9 + $0x330] sm:$0xff]
        %v2345 = vld [vmem:[#allocation9 + $0x338] sm:$0xff]
        %v2346 = vld [vmem:[#allocation9 + $0x340] sm:$0xff]
        %v2347 = vld [vmem:[#allocation9 + $0x348] sm:$0xff]
        %v2348 = vld [vmem:[#allocation9 + $0x350] sm:$0xff]
        %v2349 = vld [vmem:[#allocation9 + $0x358] sm:$0xff]
        %v2350 = vld [vmem:[#allocation9 + $0x360] sm:$0xff]
        %v2351 = vld [vmem:[#allocation9 + $0x368] sm:$0xff]
        %v2352 = vld [vmem:[#allocation9 + $0x370] sm:$0xff]
        %v2353 = vld [vmem:[#allocation9 + $0x378] sm:$0xff]
        %v2354 = vld [vmem:[#allocation9 + $0x380] sm:$0xff]
        %v2355 = vld [vmem:[#allocation9 + $0x388] sm:$0xff]
        %v2356 = vld [vmem:[#allocation9 + $0x390] sm:$0xff]
        %v2357 = vld [vmem:[#allocation9 + $0x398] sm:$0xff]
        %v2358 = vld [vmem:[#allocation9 + $0x3a0] sm:$0xff]
        %v2359 = vld [vmem:[#allocation9 + $0x3a8] sm:$0xff]
        %v2360 = vld [vmem:[#allocation9 + $0x3b0] sm:$0xff]
        %v2361 = vld [vmem:[#allocation9 + $0x3b8] sm:$0xff]
        %v2362 = vld [vmem:[#allocation9 + $0x3c0] sm:$0xff]
        %v2363 = vld [vmem:[#allocation9 + $0x3c8] sm:$0xff]
        %v2364 = vld [vmem:[#allocation9 + $0x3d0] sm:$0xff]
        %v2365 = vld [vmem:[#allocation9 + $0x3d8] sm:$0xff]
        %v2366 = vld [vmem:[#allocation9 + $0x3e0] sm:$0xff]
        %v2367 = vld [vmem:[#allocation9 + $0x3e8] sm:$0xff]
        %v2368 = vld [vmem:[#allocation9 + $0x3f0] sm:$0xff]
        %v2369 = vld [vmem:[#allocation9 + $0x3f8] sm:$0xff]
        %v2498 = vunpack.c.l.b16 %v2242
        %v2499 = vunpack.c.h.b16 %v2242
        %v2500 = vunpack.c.l.b16 %v2243
        %v2501 = vunpack.c.h.b16 %v2243
        %v2502 = vunpack.c.l.b16 %v2244
        %v2503 = vunpack.c.h.b16 %v2244
        %v2504 = vunpack.c.l.b16 %v2245
        %v2505 = vunpack.c.h.b16 %v2245
        %v2506 = vunpack.c.l.b16 %v2246
        %v2507 = vunpack.c.h.b16 %v2246
        %v2508 = vunpack.c.l.b16 %v2247
        %v2509 = vunpack.c.h.b16 %v2247
        %v2510 = vunpack.c.l.b16 %v2248
        %v2511 = vunpack.c.h.b16 %v2248
        %v2512 = vunpack.c.l.b16 %v2249
        %v2513 = vunpack.c.h.b16 %v2249
        %v2514 = vunpack.c.l.b16 %v2250
        %v2515 = vunpack.c.h.b16 %v2250
        %v2516 = vunpack.c.l.b16 %v2251
        %v2517 = vunpack.c.h.b16 %v2251
        %v2518 = vunpack.c.l.b16 %v2252
        %v2519 = vunpack.c.h.b16 %v2252
        %v2520 = vunpack.c.l.b16 %v2253
        %v2521 = vunpack.c.h.b16 %v2253
        %v2522 = vunpack.c.l.b16 %v2254
        %v2523 = vunpack.c.h.b16 %v2254
        %v2524 = vunpack.c.l.b16 %v2255
        %v2525 = vunpack.c.h.b16 %v2255
        %v2526 = vunpack.c.l.b16 %v2256
        %v2527 = vunpack.c.h.b16 %v2256
        %v2528 = vunpack.c.l.b16 %v2257
        %v2529 = vunpack.c.h.b16 %v2257
        %v2530 = vunpack.c.l.b16 %v2258
        %v2531 = vunpack.c.h.b16 %v2258
        %v2532 = vunpack.c.l.b16 %v2259
        %v2533 = vunpack.c.h.b16 %v2259
        %v2534 = vunpack.c.l.b16 %v2260
        %v2535 = vunpack.c.h.b16 %v2260
        %v2536 = vunpack.c.l.b16 %v2261
        %v2537 = vunpack.c.h.b16 %v2261
        %v2538 = vunpack.c.l.b16 %v2262
        %v2539 = vunpack.c.h.b16 %v2262
        %v2540 = vunpack.c.l.b16 %v2263
        %v2541 = vunpack.c.h.b16 %v2263
        %v2542 = vunpack.c.l.b16 %v2264
        %v2543 = vunpack.c.h.b16 %v2264
        %v2544 = vunpack.c.l.b16 %v2265
        %v2545 = vunpack.c.h.b16 %v2265
        %v2546 = vunpack.c.l.b16 %v2266
        %v2547 = vunpack.c.h.b16 %v2266
        %v2548 = vunpack.c.l.b16 %v2267
        %v2549 = vunpack.c.h.b16 %v2267
        %v2550 = vunpack.c.l.b16 %v2268
        %v2551 = vunpack.c.h.b16 %v2268
        %v2552 = vunpack.c.l.b16 %v2269
        %v2553 = vunpack.c.h.b16 %v2269
        %v2554 = vunpack.c.l.b16 %v2270
        %v2555 = vunpack.c.h.b16 %v2270
        %v2556 = vunpack.c.l.b16 %v2271
        %v2557 = vunpack.c.h.b16 %v2271
        %v2558 = vunpack.c.l.b16 %v2272
        %v2559 = vunpack.c.h.b16 %v2272
        %v2560 = vunpack.c.l.b16 %v2273
        %v2561 = vunpack.c.h.b16 %v2273
        %v2562 = vunpack.c.l.b16 %v2274
        %v2563 = vunpack.c.h.b16 %v2274
        %v2564 = vunpack.c.l.b16 %v2275
        %v2565 = vunpack.c.h.b16 %v2275
        %v2566 = vunpack.c.l.b16 %v2276
        %v2567 = vunpack.c.h.b16 %v2276
        %v2568 = vunpack.c.l.b16 %v2277
        %v2569 = vunpack.c.h.b16 %v2277
        %v2570 = vunpack.c.l.b16 %v2278
        %v2571 = vunpack.c.h.b16 %v2278
        %v2572 = vunpack.c.l.b16 %v2279
        %v2573 = vunpack.c.h.b16 %v2279
        %v2574 = vunpack.c.l.b16 %v2280
        %v2575 = vunpack.c.h.b16 %v2280
        %v2576 = vunpack.c.l.b16 %v2281
        %v2577 = vunpack.c.h.b16 %v2281
        %v2578 = vunpack.c.l.b16 %v2282
        %v2579 = vunpack.c.h.b16 %v2282
        %v2580 = vunpack.c.l.b16 %v2283
        %v2581 = vunpack.c.h.b16 %v2283
        %v2582 = vunpack.c.l.b16 %v2284
        %v2583 = vunpack.c.h.b16 %v2284
        %v2584 = vunpack.c.l.b16 %v2285
        %v2585 = vunpack.c.h.b16 %v2285
        %v2586 = vunpack.c.l.b16 %v2286
        %v2587 = vunpack.c.h.b16 %v2286
        %v2588 = vunpack.c.l.b16 %v2287
        %v2589 = vunpack.c.h.b16 %v2287
        %v2590 = vunpack.c.l.b16 %v2288
        %v2591 = vunpack.c.h.b16 %v2288
        %v2592 = vunpack.c.l.b16 %v2289
        %v2593 = vunpack.c.h.b16 %v2289
        %v2594 = vunpack.c.l.b16 %v2290
        %v2595 = vunpack.c.h.b16 %v2290
        %v2596 = vunpack.c.l.b16 %v2291
        %v2597 = vunpack.c.h.b16 %v2291
        %v2598 = vunpack.c.l.b16 %v2292
        %v2599 = vunpack.c.h.b16 %v2292
        %v2600 = vunpack.c.l.b16 %v2293
        %v2601 = vunpack.c.h.b16 %v2293
        %v2602 = vunpack.c.l.b16 %v2294
        %v2603 = vunpack.c.h.b16 %v2294
        %v2604 = vunpack.c.l.b16 %v2295
        %v2605 = vunpack.c.h.b16 %v2295
        %v2606 = vunpack.c.l.b16 %v2296
        %v2607 = vunpack.c.h.b16 %v2296
        %v2608 = vunpack.c.l.b16 %v2297
        %v2609 = vunpack.c.h.b16 %v2297
        %v2610 = vunpack.c.l.b16 %v2298
        %v2611 = vunpack.c.h.b16 %v2298
        %v2612 = vunpack.c.l.b16 %v2299
        %v2613 = vunpack.c.h.b16 %v2299
        %v2614 = vunpack.c.l.b16 %v2300
        %v2615 = vunpack.c.h.b16 %v2300
        %v2616 = vunpack.c.l.b16 %v2301
        %v2617 = vunpack.c.h.b16 %v2301
        %v2618 = vunpack.c.l.b16 %v2302
        %v2619 = vunpack.c.h.b16 %v2302
        %v2620 = vunpack.c.l.b16 %v2303
        %v2621 = vunpack.c.h.b16 %v2303
        %v2622 = vunpack.c.l.b16 %v2304
        %v2623 = vunpack.c.h.b16 %v2304
        %v2624 = vunpack.c.l.b16 %v2305
        %v2625 = vunpack.c.h.b16 %v2305
        %v2626 = vunpack.c.l.b16 %v2306
        %v2627 = vunpack.c.h.b16 %v2306
        %v2628 = vunpack.c.l.b16 %v2307
        %v2629 = vunpack.c.h.b16 %v2307
        %v2630 = vunpack.c.l.b16 %v2308
        %v2631 = vunpack.c.h.b16 %v2308
        %v2632 = vunpack.c.l.b16 %v2309
        %v2633 = vunpack.c.h.b16 %v2309
        %v2634 = vunpack.c.l.b16 %v2310
        %v2635 = vunpack.c.h.b16 %v2310
        %v2636 = vunpack.c.l.b16 %v2311
        %v2637 = vunpack.c.h.b16 %v2311
        %v2638 = vunpack.c.l.b16 %v2312
        %v2639 = vunpack.c.h.b16 %v2312
        %v2640 = vunpack.c.l.b16 %v2313
        %v2641 = vunpack.c.h.b16 %v2313
        %v2642 = vunpack.c.l.b16 %v2314
        %v2643 = vunpack.c.h.b16 %v2314
        %v2644 = vunpack.c.l.b16 %v2315
        %v2645 = vunpack.c.h.b16 %v2315
        %v2646 = vunpack.c.l.b16 %v2316
        %v2647 = vunpack.c.h.b16 %v2316
        %v2648 = vunpack.c.l.b16 %v2317
        %v2649 = vunpack.c.h.b16 %v2317
        %v2650 = vunpack.c.l.b16 %v2318
        %v2651 = vunpack.c.h.b16 %v2318
        %v2652 = vunpack.c.l.b16 %v2319
        %v2653 = vunpack.c.h.b16 %v2319
        %v2654 = vunpack.c.l.b16 %v2320
        %v2655 = vunpack.c.h.b16 %v2320
        %v2656 = vunpack.c.l.b16 %v2321
        %v2657 = vunpack.c.h.b16 %v2321
        %v2658 = vunpack.c.l.b16 %v2322
        %v2659 = vunpack.c.h.b16 %v2322
        %v2660 = vunpack.c.l.b16 %v2323
        %v2661 = vunpack.c.h.b16 %v2323
        %v2662 = vunpack.c.l.b16 %v2324
        %v2663 = vunpack.c.h.b16 %v2324
        %v2664 = vunpack.c.l.b16 %v2325
        %v2665 = vunpack.c.h.b16 %v2325
        %v2666 = vunpack.c.l.b16 %v2326
        %v2667 = vunpack.c.h.b16 %v2326
        %v2668 = vunpack.c.l.b16 %v2327
        %v2669 = vunpack.c.h.b16 %v2327
        %v2670 = vunpack.c.l.b16 %v2328
        %v2671 = vunpack.c.h.b16 %v2328
        %v2672 = vunpack.c.l.b16 %v2329
        %v2673 = vunpack.c.h.b16 %v2329
        %v2674 = vunpack.c.l.b16 %v2330
        %v2675 = vunpack.c.h.b16 %v2330
        %v2676 = vunpack.c.l.b16 %v2331
        %v2677 = vunpack.c.h.b16 %v2331
        %v2678 = vunpack.c.l.b16 %v2332
        %v2679 = vunpack.c.h.b16 %v2332
        %v2680 = vunpack.c.l.b16 %v2333
        %v2681 = vunpack.c.h.b16 %v2333
        %v2682 = vunpack.c.l.b16 %v2334
        %v2683 = vunpack.c.h.b16 %v2334
        %v2684 = vunpack.c.l.b16 %v2335
        %v2685 = vunpack.c.h.b16 %v2335
        %v2686 = vunpack.c.l.b16 %v2336
        %v2687 = vunpack.c.h.b16 %v2336
        %v2688 = vunpack.c.l.b16 %v2337
        %v2689 = vunpack.c.h.b16 %v2337
        %v2690 = vunpack.c.l.b16 %v2338
        %v2691 = vunpack.c.h.b16 %v2338
        %v2692 = vunpack.c.l.b16 %v2339
        %v2693 = vunpack.c.h.b16 %v2339
        %v2694 = vunpack.c.l.b16 %v2340
        %v2695 = vunpack.c.h.b16 %v2340
        %v2696 = vunpack.c.l.b16 %v2341
        %v2697 = vunpack.c.h.b16 %v2341
        %v2698 = vunpack.c.l.b16 %v2342
        %v2699 = vunpack.c.h.b16 %v2342
        %v2700 = vunpack.c.l.b16 %v2343
        %v2701 = vunpack.c.h.b16 %v2343
        %v2702 = vunpack.c.l.b16 %v2344
        %v2703 = vunpack.c.h.b16 %v2344
        %v2704 = vunpack.c.l.b16 %v2345
        %v2705 = vunpack.c.h.b16 %v2345
        %v2706 = vunpack.c.l.b16 %v2346
        %v2707 = vunpack.c.h.b16 %v2346
        %v2708 = vunpack.c.l.b16 %v2347
        %v2709 = vunpack.c.h.b16 %v2347
        %v2710 = vunpack.c.l.b16 %v2348
        %v2711 = vunpack.c.h.b16 %v2348
        %v2712 = vunpack.c.l.b16 %v2349
        %v2713 = vunpack.c.h.b16 %v2349
        %v2714 = vunpack.c.l.b16 %v2350
        %v2715 = vunpack.c.h.b16 %v2350
        %v2716 = vunpack.c.l.b16 %v2351
        %v2717 = vunpack.c.h.b16 %v2351
        %v2718 = vunpack.c.l.b16 %v2352
        %v2719 = vunpack.c.h.b16 %v2352
        %v2720 = vunpack.c.l.b16 %v2353
        %v2721 = vunpack.c.h.b16 %v2353
        %v2722 = vunpack.c.l.b16 %v2354
        %v2723 = vunpack.c.h.b16 %v2354
        %v2724 = vunpack.c.l.b16 %v2355
        %v2725 = vunpack.c.h.b16 %v2355
        %v2726 = vunpack.c.l.b16 %v2356
        %v2727 = vunpack.c.h.b16 %v2356
        %v2728 = vunpack.c.l.b16 %v2357
        %v2729 = vunpack.c.h.b16 %v2357
        %v2730 = vunpack.c.l.b16 %v2358
        %v2731 = vunpack.c.h.b16 %v2358
        %v2732 = vunpack.c.l.b16 %v2359
        %v2733 = vunpack.c.h.b16 %v2359
        %v2734 = vunpack.c.l.b16 %v2360
        %v2735 = vunpack.c.h.b16 %v2360
        %v2736 = vunpack.c.l.b16 %v2361
        %v2737 = vunpack.c.h.b16 %v2361
        %v2738 = vunpack.c.l.b16 %v2362
        %v2739 = vunpack.c.h.b16 %v2362
        %v2740 = vunpack.c.l.b16 %v2363
        %v2741 = vunpack.c.h.b16 %v2363
        %v2742 = vunpack.c.l.b16 %v2364
        %v2743 = vunpack.c.h.b16 %v2364
        %v2744 = vunpack.c.l.b16 %v2365
        %v2745 = vunpack.c.h.b16 %v2365
        %v2746 = vunpack.c.l.b16 %v2366
        %v2747 = vunpack.c.h.b16 %v2366
        %v2748 = vunpack.c.l.b16 %v2367
        %v2749 = vunpack.c.h.b16 %v2367
        %v2750 = vunpack.c.l.b16 %v2368
        %v2751 = vunpack.c.h.b16 %v2368
        %v2752 = vunpack.c.l.b16 %v2369
        %v2753 = vunpack.c.h.b16 %v2369
        %v2754 = vpack.c.b16 %v2502, %v2498
        %v2755 = vpack.c.b16 %v2503, %v2499
        %v2756 = vpack.c.b16 %v2504, %v2500
        %v2757 = vpack.c.b16 %v2505, %v2501
        %v2758 = vpack.c.b16 %v2510, %v2506
        %v2759 = vpack.c.b16 %v2511, %v2507
        %v2760 = vpack.c.b16 %v2512, %v2508
        %v2761 = vpack.c.b16 %v2513, %v2509
        %v2762 = vpack.c.b16 %v2518, %v2514
        %v2763 = vpack.c.b16 %v2519, %v2515
        %v2764 = vpack.c.b16 %v2520, %v2516
        %v2765 = vpack.c.b16 %v2521, %v2517
        %v2766 = vpack.c.b16 %v2526, %v2522
        %v2767 = vpack.c.b16 %v2527, %v2523
        %v2768 = vpack.c.b16 %v2528, %v2524
        %v2769 = vpack.c.b16 %v2529, %v2525
        %v2770 = vpack.c.b16 %v2534, %v2530
        %v2771 = vpack.c.b16 %v2535, %v2531
        %v2772 = vpack.c.b16 %v2536, %v2532
        %v2773 = vpack.c.b16 %v2537, %v2533
        %v2774 = vpack.c.b16 %v2542, %v2538
        %v2775 = vpack.c.b16 %v2543, %v2539
        %v2776 = vpack.c.b16 %v2544, %v2540
        %v2777 = vpack.c.b16 %v2545, %v2541
        %v2778 = vpack.c.b16 %v2550, %v2546
        %v2779 = vpack.c.b16 %v2551, %v2547
        %v2780 = vpack.c.b16 %v2552, %v2548
        %v2781 = vpack.c.b16 %v2553, %v2549
        %v2782 = vpack.c.b16 %v2558, %v2554
        %v2783 = vpack.c.b16 %v2559, %v2555
        %v2784 = vpack.c.b16 %v2560, %v2556
        %v2785 = vpack.c.b16 %v2561, %v2557
        %v2786 = vpack.c.b16 %v2566, %v2562
        %v2787 = vpack.c.b16 %v2567, %v2563
        %v2788 = vpack.c.b16 %v2568, %v2564
        %v2789 = vpack.c.b16 %v2569, %v2565
        %v2790 = vpack.c.b16 %v2574, %v2570
        %v2791 = vpack.c.b16 %v2575, %v2571
        %v2792 = vpack.c.b16 %v2576, %v2572
        %v2793 = vpack.c.b16 %v2577, %v2573
        %v2794 = vpack.c.b16 %v2582, %v2578
        %v2795 = vpack.c.b16 %v2583, %v2579
        %v2796 = vpack.c.b16 %v2584, %v2580
        %v2797 = vpack.c.b16 %v2585, %v2581
        %v2798 = vpack.c.b16 %v2590, %v2586
        %v2799 = vpack.c.b16 %v2591, %v2587
        %v2800 = vpack.c.b16 %v2592, %v2588
        %v2801 = vpack.c.b16 %v2593, %v2589
        %v2802 = vpack.c.b16 %v2598, %v2594
        %v2803 = vpack.c.b16 %v2599, %v2595
        %v2804 = vpack.c.b16 %v2600, %v2596
        %v2805 = vpack.c.b16 %v2601, %v2597
        %v2806 = vpack.c.b16 %v2606, %v2602
        %v2807 = vpack.c.b16 %v2607, %v2603
        %v2808 = vpack.c.b16 %v2608, %v2604
        %v2809 = vpack.c.b16 %v2609, %v2605
        %v2810 = vpack.c.b16 %v2614, %v2610
        %v2811 = vpack.c.b16 %v2615, %v2611
        %v2812 = vpack.c.b16 %v2616, %v2612
        %v2813 = vpack.c.b16 %v2617, %v2613
        %v2814 = vpack.c.b16 %v2622, %v2618
        %v2815 = vpack.c.b16 %v2623, %v2619
        %v2816 = vpack.c.b16 %v2624, %v2620
        %v2817 = vpack.c.b16 %v2625, %v2621
        %v2818 = vpack.c.b16 %v2630, %v2626
        %v2819 = vpack.c.b16 %v2631, %v2627
        %v2820 = vpack.c.b16 %v2632, %v2628
        %v2821 = vpack.c.b16 %v2633, %v2629
        %v2822 = vpack.c.b16 %v2638, %v2634
        %v2823 = vpack.c.b16 %v2639, %v2635
        %v2824 = vpack.c.b16 %v2640, %v2636
        %v2825 = vpack.c.b16 %v2641, %v2637
        %v2826 = vpack.c.b16 %v2646, %v2642
        %v2827 = vpack.c.b16 %v2647, %v2643
        %v2828 = vpack.c.b16 %v2648, %v2644
        %v2829 = vpack.c.b16 %v2649, %v2645
        %v2830 = vpack.c.b16 %v2654, %v2650
        %v2831 = vpack.c.b16 %v2655, %v2651
        %v2832 = vpack.c.b16 %v2656, %v2652
        %v2833 = vpack.c.b16 %v2657, %v2653
        %v2834 = vpack.c.b16 %v2662, %v2658
        %v2835 = vpack.c.b16 %v2663, %v2659
        %v2836 = vpack.c.b16 %v2664, %v2660
        %v2837 = vpack.c.b16 %v2665, %v2661
        %v2838 = vpack.c.b16 %v2670, %v2666
        %v2839 = vpack.c.b16 %v2671, %v2667
        %v2840 = vpack.c.b16 %v2672, %v2668
        %v2841 = vpack.c.b16 %v2673, %v2669
        %v2842 = vpack.c.b16 %v2678, %v2674
        %v2843 = vpack.c.b16 %v2679, %v2675
        %v2844 = vpack.c.b16 %v2680, %v2676
        %v2845 = vpack.c.b16 %v2681, %v2677
        %v2846 = vpack.c.b16 %v2686, %v2682
        %v2847 = vpack.c.b16 %v2687, %v2683
        %v2848 = vpack.c.b16 %v2688, %v2684
        %v2849 = vpack.c.b16 %v2689, %v2685
        %v2850 = vpack.c.b16 %v2694, %v2690
        %v2851 = vpack.c.b16 %v2695, %v2691
        %v2852 = vpack.c.b16 %v2696, %v2692
        %v2853 = vpack.c.b16 %v2697, %v2693
        %v2854 = vpack.c.b16 %v2702, %v2698
        %v2855 = vpack.c.b16 %v2703, %v2699
        %v2856 = vpack.c.b16 %v2704, %v2700
        %v2857 = vpack.c.b16 %v2705, %v2701
        %v2858 = vpack.c.b16 %v2710, %v2706
        %v2859 = vpack.c.b16 %v2711, %v2707
        %v2860 = vpack.c.b16 %v2712, %v2708
        %v2861 = vpack.c.b16 %v2713, %v2709
        %v2862 = vpack.c.b16 %v2718, %v2714
        %v2863 = vpack.c.b16 %v2719, %v2715
        %v2864 = vpack.c.b16 %v2720, %v2716
        %v2865 = vpack.c.b16 %v2721, %v2717
        %v2866 = vpack.c.b16 %v2726, %v2722
        %v2867 = vpack.c.b16 %v2727, %v2723
        %v2868 = vpack.c.b16 %v2728, %v2724
        %v2869 = vpack.c.b16 %v2729, %v2725
        %v2870 = vpack.c.b16 %v2734, %v2730
        %v2871 = vpack.c.b16 %v2735, %v2731
        %v2872 = vpack.c.b16 %v2736, %v2732
        %v2873 = vpack.c.b16 %v2737, %v2733
        %v2874 = vpack.c.b16 %v2742, %v2738
        %v2875 = vpack.c.b16 %v2743, %v2739
        %v2876 = vpack.c.b16 %v2744, %v2740
        %v2877 = vpack.c.b16 %v2745, %v2741
        %v2878 = vpack.c.b16 %v2750, %v2746
        %v2879 = vpack.c.b16 %v2751, %v2747
        %v2880 = vpack.c.b16 %v2752, %v2748
        %v2881 = vpack.c.b16 %v2753, %v2749
        %3010 = vmatprep.subr.bf16.mxu0 %v2755
        %3011 = vmatpush1.bf16.msra.mxu0 %v2754
        %3012 = vmatprep.subr.bf16.mxu0 %v2759
        %3013 = vmatpush1.bf16.msra.mxu0 %v2758
        %3014 = vmatprep.subr.bf16.mxu0 %v2763
        %3015 = vmatpush1.bf16.msra.mxu0 %v2762
        %3016 = vmatprep.subr.bf16.mxu0 %v2767
        %3017 = vmatpush1.bf16.msra.mxu0 %v2766
        %3018 = vmatprep.subr.bf16.mxu0 %v2771
        %3019 = vmatpush1.bf16.msra.mxu0 %v2770
        %3020 = vmatprep.subr.bf16.mxu0 %v2775
        %3021 = vmatpush1.bf16.msra.mxu0 %v2774
        %3022 = vmatprep.subr.bf16.mxu0 %v2779
        %3023 = vmatpush1.bf16.msra.mxu0 %v2778
        %3024 = vmatprep.subr.bf16.mxu0 %v2783
        %3025 = vmatpush1.bf16.msra.mxu0 %v2782
        %3026 = vmatprep.subr.bf16.mxu0 %v2787
        %3027 = vmatpush1.bf16.msra.mxu0 %v2786
        %3028 = vmatprep.subr.bf16.mxu0 %v2791
        %3029 = vmatpush1.bf16.msra.mxu0 %v2790
        %3030 = vmatprep.subr.bf16.mxu0 %v2795
        %3031 = vmatpush1.bf16.msra.mxu0 %v2794
        %3032 = vmatprep.subr.bf16.mxu0 %v2799
        %3033 = vmatpush1.bf16.msra.mxu0 %v2798
        %3034 = vmatprep.subr.bf16.mxu0 %v2803
        %3035 = vmatpush1.bf16.msra.mxu0 %v2802
        %3036 = vmatprep.subr.bf16.mxu0 %v2807
        %3037 = vmatpush1.bf16.msra.mxu0 %v2806
        %3038 = vmatprep.subr.bf16.mxu0 %v2811
        %3039 = vmatpush1.bf16.msra.mxu0 %v2810
        %3040 = vmatprep.subr.bf16.mxu0 %v2815
        %3041 = vmatpush1.bf16.msra.mxu0 %v2814
        %3042 = vmatprep.mubr.bf16.mxu0 %v2239
        %3043 = vmatmul.mubr.bf16.gmra.mrb[0].mxu0 %v2238
        %v3044 = vpop.f32.mrb[0].mxu0
        %v3045 = vadd.f32 0.0, %v3044
        %v3046 = vpop.f32.mrb[0].mxu0
        %v3047 = vadd.f32 0.0, %v3046
        %v3048 = vpop.f32.mrb[0].mxu0
        %v3049 = vpop.f32.mrb[0].mxu0
        %3050 = vdwg.mxu0
        %3051 = vmatprep.subr.bf16.mxu0 %v2819
        %3052 = vmatpush1.bf16.msra.mxu0 %v2818
        %3053 = vmatprep.subr.bf16.mxu0 %v2823
        %3054 = vmatpush1.bf16.msra.mxu0 %v2822
        %3055 = vmatprep.subr.bf16.mxu0 %v2827
        %3056 = vmatpush1.bf16.msra.mxu0 %v2826
        %3057 = vmatprep.subr.bf16.mxu0 %v2831
        %3058 = vmatpush1.bf16.msra.mxu0 %v2830
        %3059 = vmatprep.subr.bf16.mxu0 %v2835
        %3060 = vmatpush1.bf16.msra.mxu0 %v2834
        %3061 = vmatprep.subr.bf16.mxu0 %v2839
        %3062 = vmatpush1.bf16.msra.mxu0 %v2838
        %3063 = vmatprep.subr.bf16.mxu0 %v2843
        %3064 = vmatpush1.bf16.msra.mxu0 %v2842
        %3065 = vmatprep.subr.bf16.mxu0 %v2847
        %3066 = vmatpush1.bf16.msra.mxu0 %v2846
        %3067 = vmatprep.subr.bf16.mxu0 %v2851
        %3068 = vmatpush1.bf16.msra.mxu0 %v2850
        %3069 = vmatprep.subr.bf16.mxu0 %v2855
        %3070 = vmatpush1.bf16.msra.mxu0 %v2854
        %3071 = vmatprep.subr.bf16.mxu0 %v2859
        %3072 = vmatpush1.bf16.msra.mxu0 %v2858
        %3073 = vmatprep.subr.bf16.mxu0 %v2863
        %3074 = vmatpush1.bf16.msra.mxu0 %v2862
        %3075 = vmatprep.subr.bf16.mxu0 %v2867
        %3076 = vmatpush1.bf16.msra.mxu0 %v2866
        %3077 = vmatprep.subr.bf16.mxu0 %v2871
        %3078 = vmatpush1.bf16.msra.mxu0 %v2870
        %3079 = vmatprep.subr.bf16.mxu0 %v2875
        %3080 = vmatpush1.bf16.msra.mxu0 %v2874
        %3081 = vmatprep.subr.bf16.mxu0 %v2879
        %3082 = vmatpush1.bf16.msra.mxu0 %v2878
        %3083 = vmatprep.mubr.bf16.mxu0 %v2241
        %3084 = vmatmul.mubr.bf16.gmra.mrb[0].mxu0 %v2240
        %v3085 = vpop.f32.mrb[0].mxu0
        %v3086 = vadd.f32 %v3045, %v3085
        %v3087 = vpop.f32.mrb[0].mxu0
        %v3088 = vadd.f32 %v3047, %v3087
        %v3089 = vpop.f32.mrb[0].mxu0
        %v3090 = vpop.f32.mrb[0].mxu0
        %3091 = vdwg.mxu0
        %3092 = vmatprep.subr.bf16.mxu0 %v2757
        %3093 = vmatpush1.bf16.msra.mxu0 %v2756
        %3094 = vmatprep.subr.bf16.mxu0 %v2761
        %3095 = vmatpush1.bf16.msra.mxu0 %v2760
        %3096 = vmatprep.subr.bf16.mxu0 %v2765
        %3097 = vmatpush1.bf16.msra.mxu0 %v2764
        %3098 = vmatprep.subr.bf16.mxu0 %v2769
        %3099 = vmatpush1.bf16.msra.mxu0 %v2768
        %3100 = vmatprep.subr.bf16.mxu0 %v2773
        %3101 = vmatpush1.bf16.msra.mxu0 %v2772
        %3102 = vmatprep.subr.bf16.mxu0 %v2777
        %3103 = vmatpush1.bf16.msra.mxu0 %v2776
        %3104 = vmatprep.subr.bf16.mxu0 %v2781
        %3105 = vmatpush1.bf16.msra.mxu0 %v2780
        %3106 = vmatprep.subr.bf16.mxu0 %v2785
        %3107 = vmatpush1.bf16.msra.mxu0 %v2784
        %3108 = vmatprep.subr.bf16.mxu0 %v2789
        %3109 = vmatpush1.bf16.msra.mxu0 %v2788
        %3110 = vmatprep.subr.bf16.mxu0 %v2793
        %3111 = vmatpush1.bf16.msra.mxu0 %v2792
        %3112 = vmatprep.subr.bf16.mxu0 %v2797
        %3113 = vmatpush1.bf16.msra.mxu0 %v2796
        %3114 = vmatprep.subr.bf16.mxu0 %v2801
        %3115 = vmatpush1.bf16.msra.mxu0 %v2800
        %3116 = vmatprep.subr.bf16.mxu0 %v2805
        %3117 = vmatpush1.bf16.msra.mxu0 %v2804
        %3118 = vmatprep.subr.bf16.mxu0 %v2809
        %3119 = vmatpush1.bf16.msra.mxu0 %v2808
        %3120 = vmatprep.subr.bf16.mxu0 %v2813
        %3121 = vmatpush1.bf16.msra.mxu0 %v2812
        %3122 = vmatprep.subr.bf16.mxu0 %v2817
        %3123 = vmatpush1.bf16.msra.mxu0 %v2816
        %3124 = vmatprep.mubr.bf16.mxu0 %v2239
        %3125 = vmatmul.mubr.bf16.gmra.mrb[0].mxu0 %v2238
        %v3126 = vpop.f32.mrb[0].mxu0
        %v3127 = vadd.f32 0.0, %v3126
        %v3128 = vpop.f32.mrb[0].mxu0
        %v3129 = vadd.f32 0.0, %v3128
        %v3130 = vpop.f32.mrb[0].mxu0
        %v3131 = vpop.f32.mrb[0].mxu0
        %3132 = vdwg.mxu0
        %3133 = vmatprep.subr.bf16.mxu0 %v2821
        %3134 = vmatpush1.bf16.msra.mxu0 %v2820
        %3135 = vmatprep.subr.bf16.mxu0 %v2825
        %3136 = vmatpush1.bf16.msra.mxu0 %v2824
        %3137 = vmatprep.subr.bf16.mxu0 %v2829
        %3138 = vmatpush1.bf16.msra.mxu0 %v2828
        %3139 = vmatprep.subr.bf16.mxu0 %v2833
        %3140 = vmatpush1.bf16.msra.mxu0 %v2832
        %3141 = vmatprep.subr.bf16.mxu0 %v2837
        %3142 = vmatpush1.bf16.msra.mxu0 %v2836
        %3143 = vmatprep.subr.bf16.mxu0 %v2841
        %3144 = vmatpush1.bf16.msra.mxu0 %v2840
        %3145 = vmatprep.subr.bf16.mxu0 %v2845
        %3146 = vmatpush1.bf16.msra.mxu0 %v2844
        %3147 = vmatprep.subr.bf16.mxu0 %v2849
        %3148 = vmatpush1.bf16.msra.mxu0 %v2848
        %3149 = vmatprep.subr.bf16.mxu0 %v2853
        %3150 = vmatpush1.bf16.msra.mxu0 %v2852
        %3151 = vmatprep.subr.bf16.mxu0 %v2857
        %3152 = vmatpush1.bf16.msra.mxu0 %v2856
        %3153 = vmatprep.subr.bf16.mxu0 %v2861
        %3154 = vmatpush1.bf16.msra.mxu0 %v2860
        %3155 = vmatprep.subr.bf16.mxu0 %v2865
        %3156 = vmatpush1.bf16.msra.mxu0 %v2864
        %3157 = vmatprep.subr.bf16.mxu0 %v2869
        %3158 = vmatpush1.bf16.msra.mxu0 %v2868
        %3159 = vmatprep.subr.bf16.mxu0 %v2873
        %3160 = vmatpush1.bf16.msra.mxu0 %v2872
        %3161 = vmatprep.subr.bf16.mxu0 %v2877
        %3162 = vmatpush1.bf16.msra.mxu0 %v2876
        %3163 = vmatprep.subr.bf16.mxu0 %v2881
        %3164 = vmatpush1.bf16.msra.mxu0 %v2880
        %3165 = vmatprep.mubr.bf16.mxu0 %v2241
        %3166 = vmatmul.mubr.bf16.gmra.mrb[0].mxu0 %v2240
        %v3167 = vpop.f32.mrb[0].mxu0
        %v3168 = vadd.f32 %v3127, %v3167
        %v3169 = vpop.f32.mrb[0].mxu0
        %v3170 = vadd.f32 %v3129, %v3169
        %v3171 = vpop.f32.mrb[0].mxu0
        %v3172 = vpop.f32.mrb[0].mxu0
        %3173 = vdwg.mxu0
        %v3174 = vadd.f32 %v306, %v3086
        %v3175 = vadd.f32 %v307, %v3088
        %v3176 = vadd.f32 %v308, %v3168
        %v3177 = vadd.f32 %v309, %v3170
        %v3178 = vtanh.pop %v3174
        %v3179 = vtanh.pop %v3175
        %v3180 = vtanh.pop %v3176
        %v3181 = vtanh.pop %v3177
        %v3182 = vmul.f32 %v2227, %v294
        %v3183 = vmul.f32 %v2229, %v295
        %v3184 = vmul.f32 %v2231, %v296
        %v3185 = vmul.f32 %v2233, %v297
        %v3186 = vsub.f32 1.0, %v2227
        %v3187 = vsub.f32 1.0, %v2229
        %v3188 = vsub.f32 1.0, %v2231
        %v3189 = vsub.f32 1.0, %v2233
        %v3190 = vmul.f32 %v3186, %v3178
        %v3191 = vmul.f32 %v3187, %v3179
        %v3192 = vmul.f32 %v3188, %v3180
        %v3193 = vmul.f32 %v3189, %v3181
        %v3194 = vadd.f32 %v3182, %v3190
        %v3195 = vadd.f32 %v3183, %v3191
        %v3196 = vadd.f32 %v3184, %v3192
        %v3197 = vadd.f32 %v3185, %v3193
        %3198 = vst [vmem:[#allocation2] sm:$0xff] %v3194
        %3199 = vst [vmem:[#allocation2 + $0x8] sm:$0xff] %v3195
        %3200 = vst [vmem:[#allocation2 + $0x10] sm:$0xff] %v3196
        %3201 = vst [vmem:[#allocation2 + $0x18] sm:$0xff] %v3197
        %3202 = vst [vmem:[%s281] sm:$0xff] %v3194
        %3203 = vst [vmem:[%s281 + $0x8] sm:$0xff] %v3195
        %3204 = vst [vmem:[%s281 + $0x10] sm:$0xff] %v3196
        %3205 = vst [vmem:[%s281 + $0x18] sm:$0xff] %v3197
        %s3206 = sand.u32 %s141, 1
        %s3207 = scalar_lea.sflag [#allocation5], %s3206
        %s3208 = sand.u32 %s141, 1
        %s3209 = smul.addr %s3208, 32
        %s3210 = scalar_lea.vmem [#allocation11], %s3209
        // Predicated region
        $region57: #{tpu_custom_call.1} parent=35 // pred_check
          %p3211 = pneg %p151
        $region58: #{tpu_custom_call.1} parent=35 // pred_check_branch
          %3213 = sbr.rel (%p3211) target = $region60
        $region59: #{tpu_custom_call.1} parent=35 // pred_region
          %s3215 = ssub.s32 512, 512
          %3216 = vsyncadd %s3207, %s3215
          %s3217 = smul.addr %s27, 4
          %s3218 = smul.addr %s28, 4
          %s3219 = sadd.s32 %s3217, %s3218
          %s3220 = smul.addr %s3219, 128
          %s3221 = scalar_lea.hbm %s4, %s3220
          %s3223 = sshll.u32 %s3210, 4
          %s3224 = int_to_ptr.vmem [resolvable:$true] %s3223
          %3226 = dma.vmem_to_hbm [thread:$0]  %s3224, 512, %s3221, %s3207
        $region60: #{tpu_custom_call.1} parent=35 // pred_fallthru
          _
      $region36: #{tpu_custom_call.1} parent=5 // pred_fallthru
        _
      %p3227 = scmp.le.s32.totalorder 2, %s18
      // Predicated region
      $region61: #{tpu_custom_call.1} parent=5 // pred_check
        %p3228 = pneg %p3227
      $region62: #{tpu_custom_call.1} parent=5 // pred_check_branch
        %3230 = sbr.rel (%p3228) target = $region64
      $region63: #{tpu_custom_call.1} parent=5 // pred_region
        %s3231 = ssub.s32 %s18, 2
        // Predicated region
        $region65: #{tpu_custom_call.1} parent=63 // pred_check
          %p3232 = pneg %p157
        $region66: #{tpu_custom_call.1} parent=63 // pred_check_branch
          %3234 = sbr.rel (%p3232) target = $region68
        $region67: #{tpu_custom_call.1} parent=63 // pred_region
          %s3235 = sand.u32 %s142, 1
          %s3236 = scalar_lea.sflag [#allocation5], %s3235
          %s3237 = sand.u32 %s142, 1
          %s3238 = smul.addr %s3237, 32
          %s3239 = scalar_lea.vmem [#allocation11], %s3238
          %3240 = dma.done %s3236, 512
        $region68: #{tpu_custom_call.1} parent=63 // pred_fallthru
          _
      $region64: #{tpu_custom_call.1} parent=5 // pred_fallthru
        _
    $region6: #{tpu_custom_call.1} parent=1 // loop_footer
      %s22 = sadd.s32 1, %s18
    $region7: #{tpu_custom_call.1} parent=1 // loop_footer_branch
      %17 = sbr.rel target = $region3
    $region8: #{tpu_custom_call.1} parent=1 // loop_exit
      _
    %3241 = vsyncpa [#allocation4], 1
    %s3242 = scalar_lea.sflag [#allocation4], 1
    %3243 = vsyncpa %s3242, 1
    %3244 = vsyncpa [#allocation7], 1
    %3245 = vsyncpa [#allocation10], 1
    %3246 = vsyncpa [#allocation5], 1
    %s3247 = scalar_lea.sflag [#allocation5], 1
    %3248 = vsyncpa %s3247, 1

</llo_original>
